<compile_context>
chip_gen: v5e
topology: v5e:2x2
jax: 0.10.0
libtpu: 0.0.40
codegen_flags: <defaults>
</compile_context>

<pallas_src>
import jax
import jax.numpy as jnp
import numpy as np
from jax import lax
from jax.experimental import pallas as pl
from jax.experimental.pallas import tpu as pltpu


def _as_2d(x):
    x = jnp.asarray(x)
    if x.ndim == 1:
        return x.reshape(1, -1)
    if x.ndim > 2:
        return x.reshape(-1, x.shape[-1])
    return x


def _tiling(b, t, target_block_bytes):
    """Pick (tile_t, chunk, n_chunks, nt, ragged).

    tile_t : lanes per DMA block (multiple of chunk, or == t for tiny t)
    chunk  : lanes per in-register inner step (bounds live vreg count)
    """
    chunk = max(128, min(256, ((2048 // max(b, 1)) // 128) * 128))
    if t <= chunk:
        return t, t, 1, 1, False            # single full-extent block
    by_budget = max(chunk, (target_block_bytes // (4 * b)) // chunk * chunk)
    by_t = max(chunk, (t // chunk) * chunk)
    tile_t = min(by_budget, by_t)
    n_chunks = tile_t // chunk
    nt = pl.cdiv(t, tile_t)
    ragged = (nt * tile_t != t)
    return tile_t, chunk, n_chunks, nt, ragged


def _make_kernel(*, b, t, tile_t, chunk, n_chunks, ragged,
                 use_value, use_kl, use_mask,
                 eps_low, eps_high, kl_coeff, inv_n):
    n_in = 3 + int(use_value) + int(use_kl) + int(use_mask)
    n_acc = 1 + int(use_value) + int(use_kl)
    whole_block = (n_chunks == 1 and chunk == tile_t)

    def kernel(*refs):
        in_refs = refs[:n_in]
        out_ref = refs[n_in]
        acc_refs = refs[n_in + 1:]

        old_lp_ref, lp_ref, adv_ref = in_refs[0], in_refs[1], in_refs[2]
        pos = 3
        if use_value:
            values_ref = in_refs[pos]; pos += 1
        if use_kl:
            kl_ref = in_refs[pos]; pos += 1
        if use_mask:
            mask_ref = in_refs[pos]; pos += 1

        step = pl.program_id(0)
        block_col0 = step * tile_t

        @pl.when(step == 0)
        def _init():
            for r in acc_refs:
                r[...] = jnp.zeros_like(r)

        def contributions(sl, col0):
            def load(ref):
                x = ref[...] if sl is None else ref[:, sl]
                return x.astype(jnp.float32)

            old_lp = load(old_lp_ref)
            lp = load(lp_ref)
            adv = load(adv_ref)

            ratio = jnp.exp(lp - old_lp)
            if use_mask:
                m = load(mask_ref)
                ratio = ratio * m
                adv = adv * m                      # torch masks advantages
            surr1 = ratio * adv
            surr2 = jnp.clip(ratio, 1.0 - eps_low, 1.0 + eps_high) * adv
            pol = jnp.minimum(surr1, surr2)

            if ragged:
                cols = col0 + lax.broadcasted_iota(jnp.int32, pol.shape, 1)
                valid = cols < t
                pol = jnp.where(valid, pol, 0.0)
            outs = [pol]

            if use_value:
                vals = load(values_ref)
                diff = vals - (adv + old_lp)        # adv already masked
                vloss = diff * diff * m
                if ragged:
                    vloss = jnp.where(valid, vloss, 0.0)
                outs.append(vloss)

            if use_kl:
                kl = load(kl_ref)
                if ragged:
                    kl = jnp.where(valid, kl, 0.0)
                outs.append(kl)
            return tuple(outs)

        if whole_block:
            outs = contributions(None, block_col0)
            for r, c in zip(acc_refs, outs):
                r[...] += c
        else:
            def body(g, carries):
                off = pl.multiple_of(g * chunk, chunk)
                outs = contributions(pl.ds(off, chunk), block_col0 + off)
                return tuple(c + o for c, o in zip(carries, outs))

            init = tuple(jnp.zeros((b, chunk), jnp.float32)
                         for _ in range(n_acc))
            carries = lax.fori_loop(0, n_chunks, body, init,
                                    unroll=(n_chunks <= 8))
            for r, c in zip(acc_refs, carries):
                r[...] += c

        @pl.when(step == pl.num_programs(0) - 1)
        def _finalize():
            pol_loss = -jnp.sum(acc_refs[0][...]) * inv_n
            lane = lax.broadcasted_iota(jnp.int32, (8, 128), 1)
            row = jnp.where(lane == 0, pol_loss, 0.0)
            a = 1
            if use_value:
                val_loss = jnp.sum(acc_refs[a][...]) * inv_n
                row = jnp.where(lane == 1, val_loss, row)
                a += 1
            if use_kl:
                kl_loss = kl_coeff * jnp.sum(acc_refs[a][...]) * inv_n
                row = jnp.where(lane == 2, kl_loss, row)
            out_ref[...] = row.astype(out_ref.dtype)

    return kernel, n_in, n_acc


def ppo_loss(values, old_logprobs, logprobs, advantages, kl_div=None, mask=None,
             epsilon_low=0.2, epsilon_high=0.2, kl_loss_coeff=0.01,
             target_block_bytes=1 << 20):
    lp = _as_2d(logprobs)
    old_lp = _as_2d(old_logprobs)
    adv = _as_2d(advantages)
    B, T = lp.shape
    assert old_lp.shape == (B, T) and adv.shape == (B, T)

    use_mask = mask is not None
    use_value = (values is not None) and use_mask       # torch gating
    use_kl = (kl_div is not None) and (kl_loss_coeff > 0)

    inputs = [old_lp, lp, adv]
    if use_value:
        v2 = _as_2d(values); assert v2.shape == (B, T); inputs.append(v2)
    if use_kl:
        k2 = _as_2d(kl_div); assert k2.shape == (B, T); inputs.append(k2)
    if use_mask:
        m2 = _as_2d(mask); assert m2.shape == (B, T); inputs.append(m2)

    tile_t, chunk, n_chunks, nt, ragged = _tiling(B, T, target_block_bytes)

    kernel, n_in, n_acc = _make_kernel(
        b=B, t=T, tile_t=tile_t, chunk=chunk, n_chunks=n_chunks, ragged=ragged,
        use_value=use_value, use_kl=use_kl, use_mask=use_mask,
        eps_low=float(epsilon_low), eps_high=float(epsilon_high),
        kl_coeff=float(kl_loss_coeff), inv_n=1.0 / float(B * T))

    in_spec = pl.BlockSpec((B, tile_t), lambda i: (0, i))
    out_spec = pl.BlockSpec((8, 128), lambda i: (0, 0))

    bytes_in = sum(int(x.size) * x.dtype.itemsize for x in inputs)
    cost = pl.CostEstimate(flops=16 * B * T, transcendentals=B * T,
                           bytes_accessed=bytes_in + 8 * 128 * 4)

    out = pl.pallas_call(
        kernel,
        out_shape=jax.ShapeDtypeStruct((8, 128), jnp.float32),
        grid_spec=pltpu.PrefetchScalarGridSpec(
            num_scalar_prefetch=0,
            grid=(nt,),
            in_specs=[in_spec] * n_in,
            out_specs=out_spec,
            scratch_shapes=[pltpu.VMEM((B, chunk), jnp.float32)] * n_acc),
        compiler_params=pltpu.CompilerParams(
            dimension_semantics=("arbitrary",)),
        cost_estimate=cost,
    )(*inputs)

    zero = jnp.float32(0.0)
    policy_loss = out[0, 0]
    value_loss = out[0, 1] if use_value else zero
    kl_loss = out[0, 2] if use_kl else zero
    total_loss = policy_loss + value_loss + kl_loss
    return {"total_loss": total_loss, "policy_loss": policy_loss,
            "value_loss": value_loss, "kl_loss": kl_loss}


def _ppo_loss_ref(values, old_logprobs, logprobs, advantages, kl_div, mask,
                  epsilon_low=0.2, epsilon_high=0.2, kl_loss_coeff=0.01):
    # Mirrors the PyTorch module exactly.
    ratio = jnp.exp(logprobs - old_logprobs)
    if mask is not None:
        ratio = ratio * mask
        advantages = advantages * mask
    surr1 = ratio * advantages
    surr2 = jnp.clip(ratio, 1 - epsilon_low, 1 + epsilon_high) * advantages
    policy_loss = -jnp.mean(jnp.minimum(surr1, surr2))
    if values is not None and mask is not None:
        value_loss = jnp.mean(((values - (advantages + old_logprobs)) ** 2) * mask)
    else:
        value_loss = jnp.float32(0.0)
    if kl_div is not None and kl_loss_coeff > 0:
        kl_loss = kl_loss_coeff * jnp.mean(kl_div)
    else:
        kl_loss = jnp.float32(0.0)
    return {"total_loss": policy_loss + value_loss + kl_loss,
            "policy_loss": policy_loss, "value_loss": value_loss,
            "kl_loss": kl_loss}


if __name__ == "__main__":
    # B=8 (sublane-dense), T=1500 -> tile_t=1280 (5 chunks of 256 lanes),
    # 2 grid steps, ragged 220-token tail: exercises pipelining, the inner
    # chunk loop, accumulation and the in-kernel validity mask.
    B, T = 8, 1500
    key = jax.random.PRNGKey(0)
    k1, k2, k3, k4, k5, k6 = jax.random.split(key, 6)

    values = jax.random.normal(k1, (B, T), jnp.float32)
    old_logprobs = -jnp.abs(jax.random.normal(k2, (B, T), jnp.float32))
    logprobs = -jnp.abs(jax.random.normal(k3, (B, T), jnp.float32))
    advantages = jax.random.normal(k4, (B, T), jnp.float32)
    kl_div = jnp.abs(jax.random.normal(k5, (B, T), jnp.float32))
    mask = (jax.random.uniform(k6, (B, T)) > 0.2).astype(jnp.float32)

    # Full case: all optional streams present (6-input kernel).
    out = ppo_loss(values, old_logprobs, logprobs, advantages, kl_div, mask)
    out = jax.tree_util.tree_map(jax.block_until_ready, out)
    ref = _ppo_loss_ref(values, old_logprobs, logprobs, advantages, kl_div, mask)
    for name in ("policy_loss", "value_loss", "kl_loss", "total_loss"):
        np.testing.assert_allclose(np.asarray(out[name]), np.asarray(ref[name]),
                                   rtol=5e-5, atol=5e-5)

    # Specialized case: optional inputs absent (3-input policy-only kernel).
    out2 = ppo_loss(None, old_logprobs, logprobs, advantages, None, None)
    out2 = jax.tree_util.tree_map(jax.block_until_ready, out2)
    ref2 = _ppo_loss_ref(None, old_logprobs, logprobs, advantages, None, None)
    for name in ("policy_loss", "value_loss", "kl_loss", "total_loss"):
        np.testing.assert_allclose(np.asarray(out2[name]), np.asarray(ref2[name]),
                                   rtol=5e-5, atol=5e-5)

    print("KERNEL_OK")
</pallas_src>

<mosaic_0001>
module attributes {stable_mosaic.version = 11 : i64} {
  func.func @kernel(%arg0: i32, %arg1: memref<8x1280xf32, #tpu.memory_space<vmem>>, %arg2: memref<8x1280xf32, #tpu.memory_space<vmem>>, %arg3: memref<8x1280xf32, #tpu.memory_space<vmem>>, %arg4: memref<8x1280xf32, #tpu.memory_space<vmem>>, %arg5: memref<8x1280xf32, #tpu.memory_space<vmem>>, %arg6: memref<8x1280xf32, #tpu.memory_space<vmem>>, %arg7: memref<8x128xf32, #tpu.memory_space<vmem>>, %arg8: memref<8x256xf32, #tpu.memory_space<vmem>>, %arg9: memref<8x256xf32, #tpu.memory_space<vmem>>, %arg10: memref<8x256xf32, #tpu.memory_space<vmem>>) attributes {dimension_semantics = [#tpu.dimension_semantics<arbitrary>], iteration_bounds = array<i64: 2>, scalar_prefetch = 0 : i64, scratch_operands = 3 : i64, tpu.core_type = #tpu.core_type<tc>, window_params = [{transform_indices = @transform_0, window_bounds = array<i64: 8, 1280>}, {transform_indices = @transform_1, window_bounds = array<i64: 8, 1280>}, {transform_indices = @transform_2, window_bounds = array<i64: 8, 1280>}, {transform_indices = @transform_3, window_bounds = array<i64: 8, 1280>}, {transform_indices = @transform_4, window_bounds = array<i64: 8, 1280>}, {transform_indices = @transform_5, window_bounds = array<i64: 8, 1280>}, {pipeline_mode = #tpu.pipeline_mode<synchronous>, transform_indices = @transform_6, window_bounds = array<i64: 8, 128>}]} {
    %c1280_i32 = arith.constant 1280 : i32
    %0 = arith.muli %arg0, %c1280_i32 : i32
    %c0_i32 = arith.constant 0 : i32
    %1 = arith.cmpi eq, %arg0, %c0_i32 : i32
    %2 = arith.extui %1 : i1 to i32
    %c0_i32_0 = arith.constant 0 : i32
    %3 = arith.cmpi ne, %2, %c0_i32_0 : i32
    scf.if %3 {
      %cst_80 = arith.constant 0.000000e+00 : f32
      %239 = vector.broadcast %cst_80 : f32 to vector<8x256xf32>
      %c0_81 = arith.constant 0 : index
      %c0_82 = arith.constant 0 : index
      %240 = vector.load %arg8[%c0_81, %c0_82] : memref<8x256xf32, #tpu.memory_space<vmem>>, vector<8x256xf32>
      tpu.vector_store %arg8[%c0_81, %c0_82], %239 {strides = array<i32>} : memref<8x256xf32, #tpu.memory_space<vmem>>, vector<8x256xf32>,
      %cst_83 = arith.constant 0.000000e+00 : f32
      %241 = vector.broadcast %cst_83 : f32 to vector<8x256xf32>
      %c0_84 = arith.constant 0 : index
      %c0_85 = arith.constant 0 : index
      %242 = vector.load %arg9[%c0_84, %c0_85] : memref<8x256xf32, #tpu.memory_space<vmem>>, vector<8x256xf32>
      tpu.vector_store %arg9[%c0_84, %c0_85], %241 {strides = array<i32>} : memref<8x256xf32, #tpu.memory_space<vmem>>, vector<8x256xf32>,
      %cst_86 = arith.constant 0.000000e+00 : f32
      %243 = vector.broadcast %cst_86 : f32 to vector<8x256xf32>
      %c0_87 = arith.constant 0 : index
      %c0_88 = arith.constant 0 : index
      %244 = vector.load %arg10[%c0_87, %c0_88] : memref<8x256xf32, #tpu.memory_space<vmem>>, vector<8x256xf32>
      tpu.vector_store %arg10[%c0_87, %c0_88], %243 {strides = array<i32>} : memref<8x256xf32, #tpu.memory_space<vmem>>, vector<8x256xf32>,
    } else {
    }
    %cst = arith.constant 0.000000e+00 : f32
    %4 = vector.broadcast %cst : f32 to vector<8x256xf32>
    %cst_1 = arith.constant 0.000000e+00 : f32
    %5 = vector.broadcast %cst_1 : f32 to vector<8x256xf32>
    %cst_2 = arith.constant 0.000000e+00 : f32
    %6 = vector.broadcast %cst_2 : f32 to vector<8x256xf32>
    %c0_i32_3 = arith.constant 0 : i32
    %c256_i32 = arith.constant 256 : i32
    %7 = arith.muli %c0_i32_3, %c256_i32 : i32
    %8 = tpu.assume_multiple %7, 256 : i32
    %9 = arith.addi %0, %8 : i32
    %c0 = arith.constant 0 : index
    %10 = arith.index_cast %8 : i32 to index
    %11 = vector.load %arg1[%c0, %10] : memref<8x1280xf32, #tpu.memory_space<vmem>>, vector<8x256xf32>
    %c0_4 = arith.constant 0 : index
    %12 = arith.index_cast %8 : i32 to index
    %13 = vector.load %arg2[%c0_4, %12] : memref<8x1280xf32, #tpu.memory_space<vmem>>, vector<8x256xf32>
    %c0_5 = arith.constant 0 : index
    %14 = arith.index_cast %8 : i32 to index
    %15 = vector.load %arg3[%c0_5, %14] : memref<8x1280xf32, #tpu.memory_space<vmem>>, vector<8x256xf32>
    %16 = arith.subf %13, %11 : vector<8x256xf32>
    %17 = math.exp %16 : vector<8x256xf32>
    %c0_6 = arith.constant 0 : index
    %18 = arith.index_cast %8 : i32 to index
    %19 = vector.load %arg6[%c0_6, %18] : memref<8x1280xf32, #tpu.memory_space<vmem>>, vector<8x256xf32>
    %20 = arith.mulf %17, %19 : vector<8x256xf32>
    %21 = arith.mulf %15, %19 : vector<8x256xf32>
    %22 = arith.mulf %20, %21 : vector<8x256xf32>
    %cst_7 = arith.constant 8.000000e-01 : f32
    %cst_8 = arith.constant 1.200000e+00 : f32
    %23 = vector.broadcast %cst_7 : f32 to vector<8x256xf32>
    %24 = arith.maximumf %23, %20 : vector<8x256xf32>
    %25 = vector.broadcast %cst_8 : f32 to vector<8x256xf32>
    %26 = arith.minimumf %25, %24 : vector<8x256xf32>
    %27 = arith.mulf %26, %21 : vector<8x256xf32>
    %28 = arith.minimumf %22, %27 : vector<8x256xf32>
    %29 = tpu.iota {dimensions = array<i32: 1>} : vector<8x256xi32>
    %30 = vector.broadcast %9 : i32 to vector<8x256xi32>
    %31 = arith.addi %30, %29 : vector<8x256xi32>
    %c1500_i32 = arith.constant 1500 : i32
    %32 = vector.broadcast %c1500_i32 : i32 to vector<8x256xi32>
    %33 = arith.cmpi slt, %31, %32 : vector<8x256xi32>
    %cst_9 = arith.constant 0.000000e+00 : f32
    %34 = vector.broadcast %cst_9 : f32 to vector<8x256xf32>
    %35 = arith.select %33, %28, %34 : vector<8x256xi1>, vector<8x256xf32>
    %c0_10 = arith.constant 0 : index
    %36 = arith.index_cast %8 : i32 to index
    %37 = vector.load %arg4[%c0_10, %36] : memref<8x1280xf32, #tpu.memory_space<vmem>>, vector<8x256xf32>
    %38 = arith.addf %21, %11 : vector<8x256xf32>
    %39 = arith.subf %37, %38 : vector<8x256xf32>
    %40 = arith.mulf %39, %39 : vector<8x256xf32>
    %41 = arith.mulf %40, %19 : vector<8x256xf32>
    %cst_11 = arith.constant 0.000000e+00 : f32
    %42 = vector.broadcast %cst_11 : f32 to vector<8x256xf32>
    %43 = arith.select %33, %41, %42 : vector<8x256xi1>, vector<8x256xf32>
    %c0_12 = arith.constant 0 : index
    %44 = arith.index_cast %8 : i32 to index
    %45 = vector.load %arg5[%c0_12, %44] : memref<8x1280xf32, #tpu.memory_space<vmem>>, vector<8x256xf32>
    %cst_13 = arith.constant 0.000000e+00 : f32
    %46 = vector.broadcast %cst_13 : f32 to vector<8x256xf32>
    %47 = arith.select %33, %45, %46 : vector<8x256xi1>, vector<8x256xf32>
    %48 = arith.addf %4, %35 : vector<8x256xf32>
    %49 = arith.addf %5, %43 : vector<8x256xf32>
    %50 = arith.addf %6, %47 : vector<8x256xf32>
    %c1_i32 = arith.constant 1 : i32
    %c256_i32_14 = arith.constant 256 : i32
    %51 = arith.muli %c1_i32, %c256_i32_14 : i32
    %52 = tpu.assume_multiple %51, 256 : i32
    %53 = arith.addi %0, %52 : i32
    %c0_15 = arith.constant 0 : index
    %54 = arith.index_cast %52 : i32 to index
    %55 = vector.load %arg1[%c0_15, %54] : memref<8x1280xf32, #tpu.memory_space<vmem>>, vector<8x256xf32>
    %c0_16 = arith.constant 0 : index
    %56 = arith.index_cast %52 : i32 to index
    %57 = vector.load %arg2[%c0_16, %56] : memref<8x1280xf32, #tpu.memory_space<vmem>>, vector<8x256xf32>
    %c0_17 = arith.constant 0 : index
    %58 = arith.index_cast %52 : i32 to index
    %59 = vector.load %arg3[%c0_17, %58] : memref<8x1280xf32, #tpu.memory_space<vmem>>, vector<8x256xf32>
    %60 = arith.subf %57, %55 : vector<8x256xf32>
    %61 = math.exp %60 : vector<8x256xf32>
    %c0_18 = arith.constant 0 : index
    %62 = arith.index_cast %52 : i32 to index
    %63 = vector.load %arg6[%c0_18, %62] : memref<8x1280xf32, #tpu.memory_space<vmem>>, vector<8x256xf32>
    %64 = arith.mulf %61, %63 : vector<8x256xf32>
    %65 = arith.mulf %59, %63 : vector<8x256xf32>
    %66 = arith.mulf %64, %65 : vector<8x256xf32>
    %cst_19 = arith.constant 8.000000e-01 : f32
    %cst_20 = arith.constant 1.200000e+00 : f32
    %67 = vector.broadcast %cst_19 : f32 to vector<8x256xf32>
    %68 = arith.maximumf %67, %64 : vector<8x256xf32>
    %69 = vector.broadcast %cst_20 : f32 to vector<8x256xf32>
    %70 = arith.minimumf %69, %68 : vector<8x256xf32>
    %71 = arith.mulf %70, %65 : vector<8x256xf32>
    %72 = arith.minimumf %66, %71 : vector<8x256xf32>
    %73 = tpu.iota {dimensions = array<i32: 1>} : vector<8x256xi32>
    %74 = vector.broadcast %53 : i32 to vector<8x256xi32>
    %75 = arith.addi %74, %73 : vector<8x256xi32>
    %c1500_i32_21 = arith.constant 1500 : i32
    %76 = vector.broadcast %c1500_i32_21 : i32 to vector<8x256xi32>
    %77 = arith.cmpi slt, %75, %76 : vector<8x256xi32>
    %cst_22 = arith.constant 0.000000e+00 : f32
    %78 = vector.broadcast %cst_22 : f32 to vector<8x256xf32>
    %79 = arith.select %77, %72, %78 : vector<8x256xi1>, vector<8x256xf32>
    %c0_23 = arith.constant 0 : index
    %80 = arith.index_cast %52 : i32 to index
    %81 = vector.load %arg4[%c0_23, %80] : memref<8x1280xf32, #tpu.memory_space<vmem>>, vector<8x256xf32>
    %82 = arith.addf %65, %55 : vector<8x256xf32>
    %83 = arith.subf %81, %82 : vector<8x256xf32>
    %84 = arith.mulf %83, %83 : vector<8x256xf32>
    %85 = arith.mulf %84, %63 : vector<8x256xf32>
    %cst_24 = arith.constant 0.000000e+00 : f32
    %86 = vector.broadcast %cst_24 : f32 to vector<8x256xf32>
    %87 = arith.select %77, %85, %86 : vector<8x256xi1>, vector<8x256xf32>
    %c0_25 = arith.constant 0 : index
    %88 = arith.index_cast %52 : i32 to index
    %89 = vector.load %arg5[%c0_25, %88] : memref<8x1280xf32, #tpu.memory_space<vmem>>, vector<8x256xf32>
    %cst_26 = arith.constant 0.000000e+00 : f32
    %90 = vector.broadcast %cst_26 : f32 to vector<8x256xf32>
    %91 = arith.select %77, %89, %90 : vector<8x256xi1>, vector<8x256xf32>
    %92 = arith.addf %48, %79 : vector<8x256xf32>
    %93 = arith.addf %49, %87 : vector<8x256xf32>
    %94 = arith.addf %50, %91 : vector<8x256xf32>
    %c2_i32 = arith.constant 2 : i32
    %c256_i32_27 = arith.constant 256 : i32
    %95 = arith.muli %c2_i32, %c256_i32_27 : i32
    %96 = tpu.assume_multiple %95, 256 : i32
    %97 = arith.addi %0, %96 : i32
    %c0_28 = arith.constant 0 : index
    %98 = arith.index_cast %96 : i32 to index
    %99 = vector.load %arg1[%c0_28, %98] : memref<8x1280xf32, #tpu.memory_space<vmem>>, vector<8x256xf32>
    %c0_29 = arith.constant 0 : index
    %100 = arith.index_cast %96 : i32 to index
    %101 = vector.load %arg2[%c0_29, %100] : memref<8x1280xf32, #tpu.memory_space<vmem>>, vector<8x256xf32>
    %c0_30 = arith.constant 0 : index
    %102 = arith.index_cast %96 : i32 to index
    %103 = vector.load %arg3[%c0_30, %102] : memref<8x1280xf32, #tpu.memory_space<vmem>>, vector<8x256xf32>
    %104 = arith.subf %101, %99 : vector<8x256xf32>
    %105 = math.exp %104 : vector<8x256xf32>
    %c0_31 = arith.constant 0 : index
    %106 = arith.index_cast %96 : i32 to index
    %107 = vector.load %arg6[%c0_31, %106] : memref<8x1280xf32, #tpu.memory_space<vmem>>, vector<8x256xf32>
    %108 = arith.mulf %105, %107 : vector<8x256xf32>
    %109 = arith.mulf %103, %107 : vector<8x256xf32>
    %110 = arith.mulf %108, %109 : vector<8x256xf32>
    %cst_32 = arith.constant 8.000000e-01 : f32
    %cst_33 = arith.constant 1.200000e+00 : f32
    %111 = vector.broadcast %cst_32 : f32 to vector<8x256xf32>
    %112 = arith.maximumf %111, %108 : vector<8x256xf32>
    %113 = vector.broadcast %cst_33 : f32 to vector<8x256xf32>
    %114 = arith.minimumf %113, %112 : vector<8x256xf32>
    %115 = arith.mulf %114, %109 : vector<8x256xf32>
    %116 = arith.minimumf %110, %115 : vector<8x256xf32>
    %117 = tpu.iota {dimensions = array<i32: 1>} : vector<8x256xi32>
    %118 = vector.broadcast %97 : i32 to vector<8x256xi32>
    %119 = arith.addi %118, %117 : vector<8x256xi32>
    %c1500_i32_34 = arith.constant 1500 : i32
    %120 = vector.broadcast %c1500_i32_34 : i32 to vector<8x256xi32>
    %121 = arith.cmpi slt, %119, %120 : vector<8x256xi32>
    %cst_35 = arith.constant 0.000000e+00 : f32
    %122 = vector.broadcast %cst_35 : f32 to vector<8x256xf32>
    %123 = arith.select %121, %116, %122 : vector<8x256xi1>, vector<8x256xf32>
    %c0_36 = arith.constant 0 : index
    %124 = arith.index_cast %96 : i32 to index
    %125 = vector.load %arg4[%c0_36, %124] : memref<8x1280xf32, #tpu.memory_space<vmem>>, vector<8x256xf32>
    %126 = arith.addf %109, %99 : vector<8x256xf32>
    %127 = arith.subf %125, %126 : vector<8x256xf32>
    %128 = arith.mulf %127, %127 : vector<8x256xf32>
    %129 = arith.mulf %128, %107 : vector<8x256xf32>
    %cst_37 = arith.constant 0.000000e+00 : f32
    %130 = vector.broadcast %cst_37 : f32 to vector<8x256xf32>
    %131 = arith.select %121, %129, %130 : vector<8x256xi1>, vector<8x256xf32>
    %c0_38 = arith.constant 0 : index
    %132 = arith.index_cast %96 : i32 to index
    %133 = vector.load %arg5[%c0_38, %132] : memref<8x1280xf32, #tpu.memory_space<vmem>>, vector<8x256xf32>
    %cst_39 = arith.constant 0.000000e+00 : f32
    %134 = vector.broadcast %cst_39 : f32 to vector<8x256xf32>
    %135 = arith.select %121, %133, %134 : vector<8x256xi1>, vector<8x256xf32>
    %136 = arith.addf %92, %123 : vector<8x256xf32>
    %137 = arith.addf %93, %131 : vector<8x256xf32>
    %138 = arith.addf %94, %135 : vector<8x256xf32>
    %c3_i32 = arith.constant 3 : i32
    %c256_i32_40 = arith.constant 256 : i32
    %139 = arith.muli %c3_i32, %c256_i32_40 : i32
    %140 = tpu.assume_multiple %139, 256 : i32
    %141 = arith.addi %0, %140 : i32
    %c0_41 = arith.constant 0 : index
    %142 = arith.index_cast %140 : i32 to index
    %143 = vector.load %arg1[%c0_41, %142] : memref<8x1280xf32, #tpu.memory_space<vmem>>, vector<8x256xf32>
    %c0_42 = arith.constant 0 : index
    %144 = arith.index_cast %140 : i32 to index
    %145 = vector.load %arg2[%c0_42, %144] : memref<8x1280xf32, #tpu.memory_space<vmem>>, vector<8x256xf32>
    %c0_43 = arith.constant 0 : index
    %146 = arith.index_cast %140 : i32 to index
    %147 = vector.load %arg3[%c0_43, %146] : memref<8x1280xf32, #tpu.memory_space<vmem>>, vector<8x256xf32>
    %148 = arith.subf %145, %143 : vector<8x256xf32>
    %149 = math.exp %148 : vector<8x256xf32>
    %c0_44 = arith.constant 0 : index
    %150 = arith.index_cast %140 : i32 to index
    %151 = vector.load %arg6[%c0_44, %150] : memref<8x1280xf32, #tpu.memory_space<vmem>>, vector<8x256xf32>
    %152 = arith.mulf %149, %151 : vector<8x256xf32>
    %153 = arith.mulf %147, %151 : vector<8x256xf32>
    %154 = arith.mulf %152, %153 : vector<8x256xf32>
    %cst_45 = arith.constant 8.000000e-01 : f32
    %cst_46 = arith.constant 1.200000e+00 : f32
    %155 = vector.broadcast %cst_45 : f32 to vector<8x256xf32>
    %156 = arith.maximumf %155, %152 : vector<8x256xf32>
    %157 = vector.broadcast %cst_46 : f32 to vector<8x256xf32>
    %158 = arith.minimumf %157, %156 : vector<8x256xf32>
    %159 = arith.mulf %158, %153 : vector<8x256xf32>
    %160 = arith.minimumf %154, %159 : vector<8x256xf32>
    %161 = tpu.iota {dimensions = array<i32: 1>} : vector<8x256xi32>
    %162 = vector.broadcast %141 : i32 to vector<8x256xi32>
    %163 = arith.addi %162, %161 : vector<8x256xi32>
    %c1500_i32_47 = arith.constant 1500 : i32
    %164 = vector.broadcast %c1500_i32_47 : i32 to vector<8x256xi32>
    %165 = arith.cmpi slt, %163, %164 : vector<8x256xi32>
    %cst_48 = arith.constant 0.000000e+00 : f32
    %166 = vector.broadcast %cst_48 : f32 to vector<8x256xf32>
    %167 = arith.select %165, %160, %166 : vector<8x256xi1>, vector<8x256xf32>
    %c0_49 = arith.constant 0 : index
    %168 = arith.index_cast %140 : i32 to index
    %169 = vector.load %arg4[%c0_49, %168] : memref<8x1280xf32, #tpu.memory_space<vmem>>, vector<8x256xf32>
    %170 = arith.addf %153, %143 : vector<8x256xf32>
    %171 = arith.subf %169, %170 : vector<8x256xf32>
    %172 = arith.mulf %171, %171 : vector<8x256xf32>
    %173 = arith.mulf %172, %151 : vector<8x256xf32>
    %cst_50 = arith.constant 0.000000e+00 : f32
    %174 = vector.broadcast %cst_50 : f32 to vector<8x256xf32>
    %175 = arith.select %165, %173, %174 : vector<8x256xi1>, vector<8x256xf32>
    %c0_51 = arith.constant 0 : index
    %176 = arith.index_cast %140 : i32 to index
    %177 = vector.load %arg5[%c0_51, %176] : memref<8x1280xf32, #tpu.memory_space<vmem>>, vector<8x256xf32>
    %cst_52 = arith.constant 0.000000e+00 : f32
    %178 = vector.broadcast %cst_52 : f32 to vector<8x256xf32>
    %179 = arith.select %165, %177, %178 : vector<8x256xi1>, vector<8x256xf32>
    %180 = arith.addf %136, %167 : vector<8x256xf32>
    %181 = arith.addf %137, %175 : vector<8x256xf32>
    %182 = arith.addf %138, %179 : vector<8x256xf32>
    %c4_i32 = arith.constant 4 : i32
    %c256_i32_53 = arith.constant 256 : i32
    %183 = arith.muli %c4_i32, %c256_i32_53 : i32
    %184 = tpu.assume_multiple %183, 256 : i32
    %185 = arith.addi %0, %184 : i32
    %c0_54 = arith.constant 0 : index
    %186 = arith.index_cast %184 : i32 to index
    %187 = vector.load %arg1[%c0_54, %186] : memref<8x1280xf32, #tpu.memory_space<vmem>>, vector<8x256xf32>
    %c0_55 = arith.constant 0 : index
    %188 = arith.index_cast %184 : i32 to index
    %189 = vector.load %arg2[%c0_55, %188] : memref<8x1280xf32, #tpu.memory_space<vmem>>, vector<8x256xf32>
    %c0_56 = arith.constant 0 : index
    %190 = arith.index_cast %184 : i32 to index
    %191 = vector.load %arg3[%c0_56, %190] : memref<8x1280xf32, #tpu.memory_space<vmem>>, vector<8x256xf32>
    %192 = arith.subf %189, %187 : vector<8x256xf32>
    %193 = math.exp %192 : vector<8x256xf32>
    %c0_57 = arith.constant 0 : index
    %194 = arith.index_cast %184 : i32 to index
    %195 = vector.load %arg6[%c0_57, %194] : memref<8x1280xf32, #tpu.memory_space<vmem>>, vector<8x256xf32>
    %196 = arith.mulf %193, %195 : vector<8x256xf32>
    %197 = arith.mulf %191, %195 : vector<8x256xf32>
    %198 = arith.mulf %196, %197 : vector<8x256xf32>
    %cst_58 = arith.constant 8.000000e-01 : f32
    %cst_59 = arith.constant 1.200000e+00 : f32
    %199 = vector.broadcast %cst_58 : f32 to vector<8x256xf32>
    %200 = arith.maximumf %199, %196 : vector<8x256xf32>
    %201 = vector.broadcast %cst_59 : f32 to vector<8x256xf32>
    %202 = arith.minimumf %201, %200 : vector<8x256xf32>
    %203 = arith.mulf %202, %197 : vector<8x256xf32>
    %204 = arith.minimumf %198, %203 : vector<8x256xf32>
    %205 = tpu.iota {dimensions = array<i32: 1>} : vector<8x256xi32>
    %206 = vector.broadcast %185 : i32 to vector<8x256xi32>
    %207 = arith.addi %206, %205 : vector<8x256xi32>
    %c1500_i32_60 = arith.constant 1500 : i32
    %208 = vector.broadcast %c1500_i32_60 : i32 to vector<8x256xi32>
    %209 = arith.cmpi slt, %207, %208 : vector<8x256xi32>
    %cst_61 = arith.constant 0.000000e+00 : f32
    %210 = vector.broadcast %cst_61 : f32 to vector<8x256xf32>
    %211 = arith.select %209, %204, %210 : vector<8x256xi1>, vector<8x256xf32>
    %c0_62 = arith.constant 0 : index
    %212 = arith.index_cast %184 : i32 to index
    %213 = vector.load %arg4[%c0_62, %212] : memref<8x1280xf32, #tpu.memory_space<vmem>>, vector<8x256xf32>
    %214 = arith.addf %197, %187 : vector<8x256xf32>
    %215 = arith.subf %213, %214 : vector<8x256xf32>
    %216 = arith.mulf %215, %215 : vector<8x256xf32>
    %217 = arith.mulf %216, %195 : vector<8x256xf32>
    %cst_63 = arith.constant 0.000000e+00 : f32
    %218 = vector.broadcast %cst_63 : f32 to vector<8x256xf32>
    %219 = arith.select %209, %217, %218 : vector<8x256xi1>, vector<8x256xf32>
    %c0_64 = arith.constant 0 : index
    %220 = arith.index_cast %184 : i32 to index
    %221 = vector.load %arg5[%c0_64, %220] : memref<8x1280xf32, #tpu.memory_space<vmem>>, vector<8x256xf32>
    %cst_65 = arith.constant 0.000000e+00 : f32
    %222 = vector.broadcast %cst_65 : f32 to vector<8x256xf32>
    %223 = arith.select %209, %221, %222 : vector<8x256xi1>, vector<8x256xf32>
    %224 = arith.addf %180, %211 : vector<8x256xf32>
    %225 = arith.addf %181, %219 : vector<8x256xf32>
    %226 = arith.addf %182, %223 : vector<8x256xf32>
    %c5_i32 = arith.constant 5 : i32
    %c0_66 = arith.constant 0 : index
    %c0_67 = arith.constant 0 : index
    %227 = vector.load %arg8[%c0_66, %c0_67] : memref<8x256xf32, #tpu.memory_space<vmem>>, vector<8x256xf32>
    %228 = arith.addf %227, %224 : vector<8x256xf32>
    %c0_68 = arith.constant 0 : index
    %c0_69 = arith.constant 0 : index
    %229 = vector.load %arg8[%c0_68, %c0_69] : memref<8x256xf32, #tpu.memory_space<vmem>>, vector<8x256xf32>
    tpu.vector_store %arg8[%c0_68, %c0_69], %228 {strides = array<i32>} : memref<8x256xf32, #tpu.memory_space<vmem>>, vector<8x256xf32>,
    %c0_70 = arith.constant 0 : index
    %c0_71 = arith.constant 0 : index
    %230 = vector.load %arg9[%c0_70, %c0_71] : memref<8x256xf32, #tpu.memory_space<vmem>>, vector<8x256xf32>
    %231 = arith.addf %230, %225 : vector<8x256xf32>
    %c0_72 = arith.constant 0 : index
    %c0_73 = arith.constant 0 : index
    %232 = vector.load %arg9[%c0_72, %c0_73] : memref<8x256xf32, #tpu.memory_space<vmem>>, vector<8x256xf32>
    tpu.vector_store %arg9[%c0_72, %c0_73], %231 {strides = array<i32>} : memref<8x256xf32, #tpu.memory_space<vmem>>, vector<8x256xf32>,
    %c0_74 = arith.constant 0 : index
    %c0_75 = arith.constant 0 : index
    %233 = vector.load %arg10[%c0_74, %c0_75] : memref<8x256xf32, #tpu.memory_space<vmem>>, vector<8x256xf32>
    %234 = arith.addf %233, %226 : vector<8x256xf32>
    %c0_76 = arith.constant 0 : index
    %c0_77 = arith.constant 0 : index
    %235 = vector.load %arg10[%c0_76, %c0_77] : memref<8x256xf32, #tpu.memory_space<vmem>>, vector<8x256xf32>
    tpu.vector_store %arg10[%c0_76, %c0_77], %234 {strides = array<i32>} : memref<8x256xf32, #tpu.memory_space<vmem>>, vector<8x256xf32>,
    %c1_i32_78 = arith.constant 1 : i32
    %236 = arith.cmpi eq, %arg0, %c1_i32_78 : i32
    %237 = arith.extui %236 : i1 to i32
    %c0_i32_79 = arith.constant 0 : i32
    %238 = arith.cmpi ne, %237, %c0_i32_79 : i32
    scf.if %238 {
      %c0_80 = arith.constant 0 : index
      %c0_81 = arith.constant 0 : index
      %239 = vector.load %arg8[%c0_80, %c0_81] : memref<8x256xf32, #tpu.memory_space<vmem>>, vector<8x256xf32>
      %240 = vector.shape_cast %239 : vector<8x256xf32> to vector<1x8x256xf32>
      %cst_82 = arith.constant dense<0.000000e+00> : vector<1xf32>
      %241 = vector.multi_reduction <add>, %240, %cst_82 [1, 2] : vector<1x8x256xf32> to vector<1xf32>
      %242 = vector.shape_cast %241 : vector<1xf32> to vector<1x1x1xf32>
      %243 = vector.extract %242[0, 0, 0] : f32 from vector<1x1x1xf32>
      %cst_83 = arith.constant 0.000000e+00 : f32
      %244 = arith.subf %cst_83, %243 : f32
      %cst_84 = arith.constant 8.33333324E-5 : f32
      %245 = arith.mulf %244, %cst_84 : f32
      %246 = tpu.iota {dimensions = array<i32: 1>} : vector<8x128xi32>
      %c0_i32_85 = arith.constant 0 : i32
      %247 = vector.broadcast %c0_i32_85 : i32 to vector<8x128xi32>
      %248 = arith.cmpi eq, %246, %247 : vector<8x128xi32>
      %cst_86 = arith.constant 0.000000e+00 : f32
      %249 = vector.broadcast %245 : f32 to vector<8x128xf32>
      %250 = vector.broadcast %cst_86 : f32 to vector<8x128xf32>
      %251 = arith.select %248, %249, %250 : vector<8x128xi1>, vector<8x128xf32>
      %c0_87 = arith.constant 0 : index
      %c0_88 = arith.constant 0 : index
      %252 = vector.load %arg9[%c0_87, %c0_88] : memref<8x256xf32, #tpu.memory_space<vmem>>, vector<8x256xf32>
      %253 = vector.shape_cast %252 : vector<8x256xf32> to vector<1x8x256xf32>
      %cst_89 = arith.constant dense<0.000000e+00> : vector<1xf32>
      %254 = vector.multi_reduction <add>, %253, %cst_89 [1, 2] : vector<1x8x256xf32> to vector<1xf32>
      %255 = vector.shape_cast %254 : vector<1xf32> to vector<1x1x1xf32>
      %256 = vector.extract %255[0, 0, 0] : f32 from vector<1x1x1xf32>
      %cst_90 = arith.constant 8.33333324E-5 : f32
      %257 = arith.mulf %256, %cst_90 : f32
      %c1_i32_91 = arith.constant 1 : i32
      %258 = vector.broadcast %c1_i32_91 : i32 to vector<8x128xi32>
      %259 = arith.cmpi eq, %246, %258 : vector<8x128xi32>
      %260 = vector.broadcast %257 : f32 to vector<8x128xf32>
      %261 = arith.select %259, %260, %251 : vector<8x128xi1>, vector<8x128xf32>
      %c0_92 = arith.constant 0 : index
      %c0_93 = arith.constant 0 : index
      %262 = vector.load %arg10[%c0_92, %c0_93] : memref<8x256xf32, #tpu.memory_space<vmem>>, vector<8x256xf32>
      %263 = vector.shape_cast %262 : vector<8x256xf32> to vector<1x8x256xf32>
      %cst_94 = arith.constant dense<0.000000e+00> : vector<1xf32>
      %264 = vector.multi_reduction <add>, %263, %cst_94 [1, 2] : vector<1x8x256xf32> to vector<1xf32>
      %265 = vector.shape_cast %264 : vector<1xf32> to vector<1x1x1xf32>
      %266 = vector.extract %265[0, 0, 0] : f32 from vector<1x1x1xf32>
      %cst_95 = arith.constant 0.00999999977 : f32
      %267 = arith.mulf %cst_95, %266 : f32
      %cst_96 = arith.constant 8.33333324E-5 : f32
      %268 = arith.mulf %267, %cst_96 : f32
      %c2_i32_97 = arith.constant 2 : i32
      %269 = vector.broadcast %c2_i32_97 : i32 to vector<8x128xi32>
      %270 = arith.cmpi eq, %246, %269 : vector<8x128xi32>
      %271 = vector.broadcast %268 : f32 to vector<8x128xf32>
      %272 = arith.select %270, %271, %261 : vector<8x128xi1>, vector<8x128xf32>
      %c0_98 = arith.constant 0 : index
      %c0_99 = arith.constant 0 : index
      %273 = vector.load %arg7[%c0_98, %c0_99] : memref<8x128xf32, #tpu.memory_space<vmem>>, vector<8x128xf32>
      tpu.vector_store %arg7[%c0_98, %c0_99], %272 {strides = array<i32>} : memref<8x128xf32, #tpu.memory_space<vmem>>, vector<8x128xf32>,
    } else {
    }
    return
  }
  func.func @transform_0(%arg0: i32) -> (i32, i32) {
    %c0_i32 = arith.constant 0 : i32
    %c0_i32_0 = arith.constant 0 : i32
    return %c0_i32, %arg0 : i32, i32
  }
  func.func @transform_1(%arg0: i32) -> (i32, i32) {
    %c0_i32 = arith.constant 0 : i32
    %c0_i32_0 = arith.constant 0 : i32
    return %c0_i32, %arg0 : i32, i32
  }
  func.func @transform_2(%arg0: i32) -> (i32, i32) {
    %c0_i32 = arith.constant 0 : i32
    %c0_i32_0 = arith.constant 0 : i32
    return %c0_i32, %arg0 : i32, i32
  }
  func.func @transform_3(%arg0: i32) -> (i32, i32) {
    %c0_i32 = arith.constant 0 : i32
    %c0_i32_0 = arith.constant 0 : i32
    return %c0_i32, %arg0 : i32, i32
  }
  func.func @transform_4(%arg0: i32) -> (i32, i32) {
    %c0_i32 = arith.constant 0 : i32
    %c0_i32_0 = arith.constant 0 : i32
    return %c0_i32, %arg0 : i32, i32
  }
  func.func @transform_5(%arg0: i32) -> (i32, i32) {
    %c0_i32 = arith.constant 0 : i32
    %c0_i32_0 = arith.constant 0 : i32
    return %c0_i32, %arg0 : i32, i32
  }
  func.func @transform_6(%arg0: i32) -> (i32, i32) {
    %c0_i32 = arith.constant 0 : i32
    %c0_i32_0 = arith.constant 0 : i32
    %c0_i32_1 = arith.constant 0 : i32
    return %c0_i32, %c0_i32_0 : i32, i32
  }
}

</mosaic_0001>

<llo_original>
// kernel: tpu_custom_call.1
$region0: #{tpu_custom_call.1}
  #allocation0 [shape = 'u32[]', space=smem, size = 0x4, offset = 0x4, fixed_abs, tag = 'smem constant byte address 0x4 - core index']
  #allocation1 [shape = 'u32[72,128]{1,0:T(1,128)}', space=vmem, size = 0x9000, scoped, tag = 'internal scratch']
  #allocation2 [shape = 'f32[8,256]{1,0:T(8,128)}', space=vmem, size = 0x2000, scoped, tag = 'scratch operand']
  #allocation3 [shape = 'f32[8,256]{1,0:T(8,128)}', space=vmem, size = 0x2000, scoped, tag = 'scratch operand']
  #allocation4 [shape = 'f32[8,256]{1,0:T(8,128)}', space=vmem, size = 0x2000, scoped, tag = 'scratch operand']
  %s0 = inlined_call_operand.hbm [shape: f32[8,1500], index: 0, kind: input, shape index: {}]
  %s1 = inlined_call_operand.hbm [shape: f32[8,1500], index: 1, kind: input, shape index: {}]
  %s2 = inlined_call_operand.hbm [shape: f32[8,1500], index: 2, kind: input, shape index: {}]
  %s3 = inlined_call_operand.hbm [shape: f32[8,1500], index: 3, kind: input, shape index: {}]
  %s4 = inlined_call_operand.hbm [shape: f32[8,1500], index: 4, kind: input, shape index: {}]
  %s5 = inlined_call_operand.hbm [shape: f32[8,1500], index: 5, kind: input, shape index: {}]
  %s6 = inlined_call_operand.hbm [shape: f32[8,128], index: 6, kind: output, shape index: {}]
  %s7 = sld [smem:[#allocation0]]
  $region89: #{tpu_custom_call.1} parent=0
    _
  %s9 = ssub.s32 1, %s7
  %s10 = scalar_select 0, %s9, %s7
  $region1: #{tpu_custom_call.1} parent=0
    #allocation5 [shape = 'u8[81920]{0}', space=vmem, size = 0x14000, scoped, tag = 'input window, operand 0']
    #allocation6 [shape = 's32[2]{0}', space=sflag, size = 0x8, scoped, tag = 'scoped memory for tpu_custom_call.1']
    #allocation7 [shape = 's32[2]{0}', space=sflag, size = 0x8, scoped, tag = 'scoped memory for tpu_custom_call.1']
    #allocation8 [shape = 'u8[81920]{0}', space=vmem, size = 0x14000, scoped, tag = 'input window, operand 1']
    #allocation9 [shape = 's32[2]{0}', space=sflag, size = 0x8, scoped, tag = 'scoped memory for tpu_custom_call.1']
    #allocation10 [shape = 'u8[81920]{0}', space=vmem, size = 0x14000, scoped, tag = 'input window, operand 2']
    #allocation11 [shape = 'u8[81920]{0}', space=vmem, size = 0x14000, scoped, tag = 'input window, operand 3']
    #allocation12 [shape = 's32[2]{0}', space=sflag, size = 0x8, scoped, tag = 'scoped memory for tpu_custom_call.1']
    #allocation13 [shape = 'u8[81920]{0}', space=vmem, size = 0x14000, scoped, tag = 'input window, operand 4']
    #allocation14 [shape = 'u8[81920]{0}', space=vmem, size = 0x14000, scoped, tag = 'input window, operand 5']
    #allocation15 [shape = 's32[2]{0}', space=sflag, size = 0x8, scoped, tag = 'scoped memory for tpu_custom_call.1']
    #allocation16 [shape = 'u8[4096]{0}', space=vmem, size = 0x1000, scoped, tag = 'output window, operand 0, single buffered']
    %11 = vsyncpa [#allocation6], 0
    %s12 = scalar_lea.sflag [#allocation6], 1
    %13 = vsyncpa %s12, 0
    %14 = vsyncpa [#allocation9], 0
    %s15 = scalar_lea.sflag [#allocation9], 1
    %16 = vsyncpa %s15, 0
    %17 = vsyncpa [#allocation12], 0
    %s18 = scalar_lea.sflag [#allocation12], 1
    %19 = vsyncpa %s18, 0
    %20 = vsyncpa [#allocation15], 0
    %s21 = scalar_lea.sflag [#allocation15], 1
    %22 = vsyncpa %s21, 0
    %23 = vsyncpa [#allocation7], 0
    loop: start=0, step=1, limit=4
    $region2: #{tpu_custom_call.1} parent=1 // loop_pre_header
      _
    $region3: #{tpu_custom_call.1} parent=1 // loop_header
      %s25 = sphi 0, %s29
      %p26 = scmp.ge.s32.totalorder %s25, 4
      %s35 = sphi 0, %s37
      %s38 = sphi 0, %s35
      %s39 = sphi 0, %s38
      %s55 = sphi 0, %s39
      %s61 = sphi 0, %s63
      %s64 = sphi 0, %s61
      %s65 = sphi 0, %s64
      %s81 = sphi 0, %s65
      %s87 = sphi 0, %s89
      %s90 = sphi 0, %s87
      %s91 = sphi 0, %s90
      %s107 = sphi 0, %s91
      %s113 = sphi 0, %s115
      %s116 = sphi 0, %s113
      %s117 = sphi 0, %s116
      %s133 = sphi 0, %s117
      %s139 = sphi 0, %s141
      %s142 = sphi 0, %s139
      %s143 = sphi 0, %s142
      %s159 = sphi 0, %s143
      %s165 = sphi 0, %s167
      %s168 = sphi 0, %s165
      %s169 = sphi 0, %s168
      %s185 = sphi 0, %s169
      %s189 = sphi 0, %s189
      %s191 = sphi 0, %s189
      %s192 = sphi 0, %s191
      %s206 = sphi 0, %s192
    $region4: #{tpu_custom_call.1} parent=1 // loop_header_branch
      %28 = sbr.rel (%p26) target = $region8
    $region5: #{tpu_custom_call.1} parent=1 // loop_body
      %s30 = ssub.s32 %s25, 1
      %s31 = ssub.s32 %s25, 2
      %s32 = sadd.s32 %s25, 1
      %s33 = ssub.s32 %s25, %s32
      %p34 = scmp.eq.s32.totalorder %s33, 0
      %s36 = sadd.s32 %s35, 1
      %s37 = scalar_select %p34, %s35, %s36
      %p40 = pneg %p34
      %p41 = scmp.eq.s32.totalorder %s25, 1
      %p42 = por %p40, %p41
      %p43 = scmp.ne.s32.totalorder %s35, %s38
      %p44 = scmp.eq.s32.totalorder %s25, 0
      %p45 = por %p43, %p44
      %p46 = scmp.ne.s32.totalorder %s35, %s38
      %p47 = scmp.eq.s32.totalorder %s30, 1
      %p48 = por %p46, %p47
      %p49 = scmp.ne.s32.totalorder %s38, %s39
      %p50 = scmp.eq.s32.totalorder %s30, 0
      %p51 = por %p49, %p50
      %p52 = scmp.ne.s32.totalorder %s38, %s39
      %p53 = scmp.eq.s32.totalorder %s31, 1
      %p54 = por %p52, %p53
      %p56 = scmp.ne.s32.totalorder %s39, %s55
      %p57 = scmp.eq.s32.totalorder %s31, 0
      %p58 = por %p56, %p57
      %s59 = ssub.s32 %s25, %s32
      %p60 = scmp.eq.s32.totalorder %s59, 0
      %s62 = sadd.s32 %s61, 1
      %s63 = scalar_select %p60, %s61, %s62
      %p66 = pneg %p60
      %p67 = scmp.eq.s32.totalorder %s25, 1
      %p68 = por %p66, %p67
      %p69 = scmp.ne.s32.totalorder %s61, %s64
      %p70 = scmp.eq.s32.totalorder %s25, 0
      %p71 = por %p69, %p70
      %p72 = scmp.ne.s32.totalorder %s61, %s64
      %p73 = scmp.eq.s32.totalorder %s30, 1
      %p74 = por %p72, %p73
      %p75 = scmp.ne.s32.totalorder %s64, %s65
      %p76 = scmp.eq.s32.totalorder %s30, 0
      %p77 = por %p75, %p76
      %p78 = scmp.ne.s32.totalorder %s64, %s65
      %p79 = scmp.eq.s32.totalorder %s31, 1
      %p80 = por %p78, %p79
      %p82 = scmp.ne.s32.totalorder %s65, %s81
      %p83 = scmp.eq.s32.totalorder %s31, 0
      %p84 = por %p82, %p83
      %s85 = ssub.s32 %s25, %s32
      %p86 = scmp.eq.s32.totalorder %s85, 0
      %s88 = sadd.s32 %s87, 1
      %s89 = scalar_select %p86, %s87, %s88
      %p92 = pneg %p86
      %p93 = scmp.eq.s32.totalorder %s25, 1
      %p94 = por %p92, %p93
      %p95 = scmp.ne.s32.totalorder %s87, %s90
      %p96 = scmp.eq.s32.totalorder %s25, 0
      %p97 = por %p95, %p96
      %p98 = scmp.ne.s32.totalorder %s87, %s90
      %p99 = scmp.eq.s32.totalorder %s30, 1
      %p100 = por %p98, %p99
      %p101 = scmp.ne.s32.totalorder %s90, %s91
      %p102 = scmp.eq.s32.totalorder %s30, 0
      %p103 = por %p101, %p102
      %p104 = scmp.ne.s32.totalorder %s90, %s91
      %p105 = scmp.eq.s32.totalorder %s31, 1
      %p106 = por %p104, %p105
      %p108 = scmp.ne.s32.totalorder %s91, %s107
      %p109 = scmp.eq.s32.totalorder %s31, 0
      %p110 = por %p108, %p109
      %s111 = ssub.s32 %s25, %s32
      %p112 = scmp.eq.s32.totalorder %s111, 0
      %s114 = sadd.s32 %s113, 1
      %s115 = scalar_select %p112, %s113, %s114
      %p118 = pneg %p112
      %p119 = scmp.eq.s32.totalorder %s25, 1
      %p120 = por %p118, %p119
      %p121 = scmp.ne.s32.totalorder %s113, %s116
      %p122 = scmp.eq.s32.totalorder %s25, 0
      %p123 = por %p121, %p122
      %p124 = scmp.ne.s32.totalorder %s113, %s116
      %p125 = scmp.eq.s32.totalorder %s30, 1
      %p126 = por %p124, %p125
      %p127 = scmp.ne.s32.totalorder %s116, %s117
      %p128 = scmp.eq.s32.totalorder %s30, 0
      %p129 = por %p127, %p128
      %p130 = scmp.ne.s32.totalorder %s116, %s117
      %p131 = scmp.eq.s32.totalorder %s31, 1
      %p132 = por %p130, %p131
      %p134 = scmp.ne.s32.totalorder %s117, %s133
      %p135 = scmp.eq.s32.totalorder %s31, 0
      %p136 = por %p134, %p135
      %s137 = ssub.s32 %s25, %s32
      %p138 = scmp.eq.s32.totalorder %s137, 0
      %s140 = sadd.s32 %s139, 1
      %s141 = scalar_select %p138, %s139, %s140
      %p144 = pneg %p138
      %p145 = scmp.eq.s32.totalorder %s25, 1
      %p146 = por %p144, %p145
      %p147 = scmp.ne.s32.totalorder %s139, %s142
      %p148 = scmp.eq.s32.totalorder %s25, 0
      %p149 = por %p147, %p148
      %p150 = scmp.ne.s32.totalorder %s139, %s142
      %p151 = scmp.eq.s32.totalorder %s30, 1
      %p152 = por %p150, %p151
      %p153 = scmp.ne.s32.totalorder %s142, %s143
      %p154 = scmp.eq.s32.totalorder %s30, 0
      %p155 = por %p153, %p154
      %p156 = scmp.ne.s32.totalorder %s142, %s143
      %p157 = scmp.eq.s32.totalorder %s31, 1
      %p158 = por %p156, %p157
      %p160 = scmp.ne.s32.totalorder %s143, %s159
      %p161 = scmp.eq.s32.totalorder %s31, 0
      %p162 = por %p160, %p161
      %s163 = ssub.s32 %s25, %s32
      %p164 = scmp.eq.s32.totalorder %s163, 0
      %s166 = sadd.s32 %s165, 1
      %s167 = scalar_select %p164, %s165, %s166
      %p170 = pneg %p164
      %p171 = scmp.eq.s32.totalorder %s25, 1
      %p172 = por %p170, %p171
      %p173 = scmp.ne.s32.totalorder %s165, %s168
      %p174 = scmp.eq.s32.totalorder %s25, 0
      %p175 = por %p173, %p174
      %p176 = scmp.ne.s32.totalorder %s165, %s168
      %p177 = scmp.eq.s32.totalorder %s30, 1
      %p178 = por %p176, %p177
      %p179 = scmp.ne.s32.totalorder %s168, %s169
      %p180 = scmp.eq.s32.totalorder %s30, 0
      %p181 = por %p179, %p180
      %p182 = scmp.ne.s32.totalorder %s168, %s169
      %p183 = scmp.eq.s32.totalorder %s31, 1
      %p184 = por %p182, %p183
      %p186 = scmp.ne.s32.totalorder %s169, %s185
      %p187 = scmp.eq.s32.totalorder %s31, 0
      %p188 = por %p186, %p187
      %s190 = sadd.s32 %s189, 1
      %p193 = scmp.eq.s32.totalorder %s25, 1
      %p194 = scmp.ne.s32.totalorder %s189, %s191
      %p195 = scmp.eq.s32.totalorder %s25, 0
      %p196 = por %p194, %p195
      %p197 = scmp.ne.s32.totalorder %s189, %s191
      %p198 = scmp.eq.s32.totalorder %s30, 1
      %p199 = por %p197, %p198
      %p200 = scmp.ne.s32.totalorder %s191, %s192
      %p201 = scmp.eq.s32.totalorder %s30, 0
      %p202 = por %p200, %p201
      %p203 = scmp.ne.s32.totalorder %s191, %s192
      %p204 = scmp.eq.s32.totalorder %s31, 1
      %p205 = por %p203, %p204
      %p207 = scmp.ne.s32.totalorder %s192, %s206
      %p208 = scmp.eq.s32.totalorder %s31, 0
      %p209 = por %p207, %p208
      %p210 = scmp.le.s32.totalorder 1, %s25
      %p211 = scmp.lt.s32.totalorder %s25, 3
      %p212 = pnand %p210, %p211
      %p213 = pneg %p212
      // Predicated region
      $region9: #{tpu_custom_call.1} parent=5 // pred_check
        _
      $region10: #{tpu_custom_call.1} parent=5 // pred_check_branch
        %215 = sbr.rel (%p212) target = $region12
      $region11: #{tpu_custom_call.1} parent=5 // pred_region
        %s216 = ssub.s32 %s25, 1
      $region12: #{tpu_custom_call.1} parent=5 // pred_fallthru
        _
      %p217 = scmp.lt.s32.totalorder %s25, 2
      // Predicated region
      $region13: #{tpu_custom_call.1} parent=5 // pred_check
        %p218 = pneg %p217
      $region14: #{tpu_custom_call.1} parent=5 // pred_check_branch
        %220 = sbr.rel (%p218) target = $region16
      $region15: #{tpu_custom_call.1} parent=5 // pred_region
        // Predicated region
        $region17: #{tpu_custom_call.1} parent=15 // pred_check
          %p221 = pneg %p45
        $region18: #{tpu_custom_call.1} parent=15 // pred_check_branch
          %223 = sbr.rel (%p221) target = $region20
        $region19: #{tpu_custom_call.1} parent=15 // pred_region
          %s224 = sand.u32 %s35, 1
          %s225 = scalar_lea.sflag [#allocation6], %s224
          %s226 = sand.u32 %s35, 1
          %s227 = smul.addr %s226, 80
          %s228 = scalar_lea.vmem [#allocation5], %s227
          %s229 = smul.u32 10, %s25
          %s230 = ssub.s32 12, %s229
          %p231 = scmp.lt.s32.totalorder %s230, 10
          %s232 = scalar_select %p231, %s230, 10
          %s233 = smul.u32 8, %s232
          %s234 = ssub.s32 80, %s233
          %s235 = sshll.u32 %s234, 4
          %236 = vsyncadd %s225, %s235
          %p237 = scmp.ne.s32.totalorder 0, %s233
          %s238 = smul.addr %s229, 8
          %s239 = scalar_lea.hbm %s0, %s238
          %s240 = smul.u32 %s232, 8
          %s241 = sshll.u32 %s240, 4
          %s242 = sshll.u32 %s239, 4
          %s243 = int_to_ptr.hbm [resolvable:$true] %s242
          %s244 = sshll.u32 %s228, 4
          %s245 = int_to_ptr.vmem [resolvable:$true] %s244
          %247 = dma.hbm_to_vmem [thread:$0]  (%p237), %s243, %s241, %s245, %s225
        $region20: #{tpu_custom_call.1} parent=15 // pred_fallthru
          _
        // Predicated region
        $region21: #{tpu_custom_call.1} parent=15 // pred_check
          %p248 = pneg %p71
        $region22: #{tpu_custom_call.1} parent=15 // pred_check_branch
          %250 = sbr.rel (%p248) target = $region24
        $region23: #{tpu_custom_call.1} parent=15 // pred_region
          %s251 = sand.u32 %s25, 1
          %s252 = scalar_lea.sflag [#allocation9], %s251
          %s253 = sand.u32 %s61, 1
          %s254 = smul.addr %s253, 80
          %s255 = scalar_lea.vmem [#allocation8], %s254
          %s256 = smul.u32 10, %s25
          %s257 = ssub.s32 12, %s256
          %p258 = scmp.lt.s32.totalorder %s257, 10
          %s259 = scalar_select %p258, %s257, 10
          %s260 = smul.u32 8, %s259
          %s261 = ssub.s32 80, %s260
          %s262 = sshll.u32 %s261, 4
          %263 = vsyncadd %s252, %s262
          %p264 = scmp.ne.s32.totalorder 0, %s260
          %s265 = smul.addr %s256, 8
          %s266 = scalar_lea.hbm %s1, %s265
          %s267 = smul.u32 %s259, 8
          %s268 = sshll.u32 %s267, 4
          %s269 = sshll.u32 %s266, 4
          %s270 = int_to_ptr.hbm [resolvable:$true] %s269
          %s271 = sshll.u32 %s255, 4
          %s272 = int_to_ptr.vmem [resolvable:$true] %s271
          %274 = dma.hbm_to_vmem [thread:$0]  (%p264), %s270, %s268, %s272, %s252
        $region24: #{tpu_custom_call.1} parent=15 // pred_fallthru
          _
        // Predicated region
        $region25: #{tpu_custom_call.1} parent=15 // pred_check
          %p275 = pneg %p97
        $region26: #{tpu_custom_call.1} parent=15 // pred_check_branch
          %277 = sbr.rel (%p275) target = $region28
        $region27: #{tpu_custom_call.1} parent=15 // pred_region
          %s278 = sand.u32 %s25, 1
          %s279 = scalar_lea.sflag [#allocation9], %s278
          %s280 = sand.u32 %s87, 1
          %s281 = smul.addr %s280, 80
          %s282 = scalar_lea.vmem [#allocation10], %s281
          %s283 = smul.u32 10, %s25
          %s284 = ssub.s32 12, %s283
          %p285 = scmp.lt.s32.totalorder %s284, 10
          %s286 = scalar_select %p285, %s284, 10
          %s287 = smul.u32 8, %s286
          %s288 = ssub.s32 80, %s287
          %s289 = sshll.u32 %s288, 4
          %290 = vsyncadd %s279, %s289
          %p291 = scmp.ne.s32.totalorder 0, %s287
          %s292 = smul.addr %s283, 8
          %s293 = scalar_lea.hbm %s2, %s292
          %s294 = smul.u32 %s286, 8
          %s295 = sshll.u32 %s294, 4
          %s296 = sshll.u32 %s293, 4
          %s297 = int_to_ptr.hbm [resolvable:$true] %s296
          %s298 = sshll.u32 %s282, 4
          %s299 = int_to_ptr.vmem [resolvable:$true] %s298
          %301 = dma.hbm_to_vmem [thread:$0]  (%p291), %s297, %s295, %s299, %s279
        $region28: #{tpu_custom_call.1} parent=15 // pred_fallthru
          _
        // Predicated region
        $region29: #{tpu_custom_call.1} parent=15 // pred_check
          %p302 = pneg %p123
        $region30: #{tpu_custom_call.1} parent=15 // pred_check_branch
          %304 = sbr.rel (%p302) target = $region32
        $region31: #{tpu_custom_call.1} parent=15 // pred_region
          %s305 = sand.u32 %s25, 1
          %s306 = scalar_lea.sflag [#allocation12], %s305
          %s307 = sand.u32 %s113, 1
          %s308 = smul.addr %s307, 80
          %s309 = scalar_lea.vmem [#allocation11], %s308
          %s310 = smul.u32 10, %s25
          %s311 = ssub.s32 12, %s310
          %p312 = scmp.lt.s32.totalorder %s311, 10
          %s313 = scalar_select %p312, %s311, 10
          %s314 = smul.u32 8, %s313
          %s315 = ssub.s32 80, %s314
          %s316 = sshll.u32 %s315, 4
          %317 = vsyncadd %s306, %s316
          %p318 = scmp.ne.s32.totalorder 0, %s314
          %s319 = smul.addr %s310, 8
          %s320 = scalar_lea.hbm %s3, %s319
          %s321 = smul.u32 %s313, 8
          %s322 = sshll.u32 %s321, 4
          %s323 = sshll.u32 %s320, 4
          %s324 = int_to_ptr.hbm [resolvable:$true] %s323
          %s325 = sshll.u32 %s309, 4
          %s326 = int_to_ptr.vmem [resolvable:$true] %s325
          %328 = dma.hbm_to_vmem [thread:$0]  (%p318), %s324, %s322, %s326, %s306
        $region32: #{tpu_custom_call.1} parent=15 // pred_fallthru
          _
        // Predicated region
        $region33: #{tpu_custom_call.1} parent=15 // pred_check
          %p329 = pneg %p149
        $region34: #{tpu_custom_call.1} parent=15 // pred_check_branch
          %331 = sbr.rel (%p329) target = $region36
        $region35: #{tpu_custom_call.1} parent=15 // pred_region
          %s332 = sand.u32 %s25, 1
          %s333 = scalar_lea.sflag [#allocation12], %s332
          %s334 = sand.u32 %s139, 1
          %s335 = smul.addr %s334, 80
          %s336 = scalar_lea.vmem [#allocation13], %s335
          %s337 = smul.u32 10, %s25
          %s338 = ssub.s32 12, %s337
          %p339 = scmp.lt.s32.totalorder %s338, 10
          %s340 = scalar_select %p339, %s338, 10
          %s341 = smul.u32 8, %s340
          %s342 = ssub.s32 80, %s341
          %s343 = sshll.u32 %s342, 4
          %344 = vsyncadd %s333, %s343
          %p345 = scmp.ne.s32.totalorder 0, %s341
          %s346 = smul.addr %s337, 8
          %s347 = scalar_lea.hbm %s4, %s346
          %s348 = smul.u32 %s340, 8
          %s349 = sshll.u32 %s348, 4
          %s350 = sshll.u32 %s347, 4
          %s351 = int_to_ptr.hbm [resolvable:$true] %s350
          %s352 = sshll.u32 %s336, 4
          %s353 = int_to_ptr.vmem [resolvable:$true] %s352
          %355 = dma.hbm_to_vmem [thread:$0]  (%p345), %s351, %s349, %s353, %s333
        $region36: #{tpu_custom_call.1} parent=15 // pred_fallthru
          _
        // Predicated region
        $region37: #{tpu_custom_call.1} parent=15 // pred_check
          %p356 = pneg %p175
        $region38: #{tpu_custom_call.1} parent=15 // pred_check_branch
          %358 = sbr.rel (%p356) target = $region40
        $region39: #{tpu_custom_call.1} parent=15 // pred_region
          %s359 = sand.u32 %s165, 1
          %s360 = scalar_lea.sflag [#allocation15], %s359
          %s361 = sand.u32 %s165, 1
          %s362 = smul.addr %s361, 80
          %s363 = scalar_lea.vmem [#allocation14], %s362
          %s364 = smul.u32 10, %s25
          %s365 = ssub.s32 12, %s364
          %p366 = scmp.lt.s32.totalorder %s365, 10
          %s367 = scalar_select %p366, %s365, 10
          %s368 = smul.u32 8, %s367
          %s369 = ssub.s32 80, %s368
          %s370 = sshll.u32 %s369, 4
          %371 = vsyncadd %s360, %s370
          %p372 = scmp.ne.s32.totalorder 0, %s368
          %s373 = smul.addr %s364, 8
          %s374 = scalar_lea.hbm %s5, %s373
          %s375 = smul.u32 %s367, 8
          %s376 = sshll.u32 %s375, 4
          %s377 = sshll.u32 %s374, 4
          %s378 = int_to_ptr.hbm [resolvable:$true] %s377
          %s379 = sshll.u32 %s363, 4
          %s380 = int_to_ptr.vmem [resolvable:$true] %s379
          %382 = dma.hbm_to_vmem [thread:$0]  (%p372), %s378, %s376, %s380, %s360
        $region40: #{tpu_custom_call.1} parent=15 // pred_fallthru
          _
      $region16: #{tpu_custom_call.1} parent=5 // pred_fallthru
        _
      %p383 = scmp.le.s32.totalorder 1, %s25
      %p384 = scmp.lt.s32.totalorder %s25, 3
      %p385 = pnand %p383, %p384
      %p386 = pneg %p385
      // Predicated region
      $region41: #{tpu_custom_call.1} parent=5 // pred_check
        _
      $region42: #{tpu_custom_call.1} parent=5 // pred_check_branch
        %388 = sbr.rel (%p385) target = $region44
      $region43: #{tpu_custom_call.1} parent=5 // pred_region
        %s389 = ssub.s32 %s25, 1
        %s390 = sand.u32 %s38, 1
        %s391 = scalar_lea.sflag [#allocation6], %s390
        %s392 = sand.u32 %s38, 1
        %s393 = smul.addr %s392, 80
        %s394 = scalar_lea.vmem [#allocation5], %s393
        // Predicated region
        $region45: #{tpu_custom_call.1} parent=43 // pred_check
          %p395 = pneg %p51
        $region46: #{tpu_custom_call.1} parent=43 // pred_check_branch
          %397 = sbr.rel (%p395) target = $region48
        $region47: #{tpu_custom_call.1} parent=43 // pred_region
          %399 = dma.done %s391, 1280
        $region48: #{tpu_custom_call.1} parent=43 // pred_fallthru
          _
        %s400 = sand.u32 %s30, 1
        %s401 = scalar_lea.sflag [#allocation9], %s400
        %s402 = sand.u32 %s64, 1
        %s403 = smul.addr %s402, 80
        %s404 = scalar_lea.vmem [#allocation8], %s403
        // Predicated region
        $region49: #{tpu_custom_call.1} parent=43 // pred_check
          %p405 = pneg %p77
        $region50: #{tpu_custom_call.1} parent=43 // pred_check_branch
          %407 = sbr.rel (%p405) target = $region52
        $region51: #{tpu_custom_call.1} parent=43 // pred_region
          %409 = dma.done %s401, 1280
        $region52: #{tpu_custom_call.1} parent=43 // pred_fallthru
          _
        %s410 = sand.u32 %s30, 1
        %s411 = scalar_lea.sflag [#allocation9], %s410
        %s412 = sand.u32 %s90, 1
        %s413 = smul.addr %s412, 80
        %s414 = scalar_lea.vmem [#allocation10], %s413
        // Predicated region
        $region53: #{tpu_custom_call.1} parent=43 // pred_check
          %p415 = pneg %p103
        $region54: #{tpu_custom_call.1} parent=43 // pred_check_branch
          %417 = sbr.rel (%p415) target = $region56
        $region55: #{tpu_custom_call.1} parent=43 // pred_region
          %419 = dma.done %s411, 1280
        $region56: #{tpu_custom_call.1} parent=43 // pred_fallthru
          _
        %s420 = sand.u32 %s30, 1
        %s421 = scalar_lea.sflag [#allocation12], %s420
        %s422 = sand.u32 %s116, 1
        %s423 = smul.addr %s422, 80
        %s424 = scalar_lea.vmem [#allocation11], %s423
        // Predicated region
        $region57: #{tpu_custom_call.1} parent=43 // pred_check
          %p425 = pneg %p129
        $region58: #{tpu_custom_call.1} parent=43 // pred_check_branch
          %427 = sbr.rel (%p425) target = $region60
        $region59: #{tpu_custom_call.1} parent=43 // pred_region
          %429 = dma.done %s421, 1280
        $region60: #{tpu_custom_call.1} parent=43 // pred_fallthru
          _
        %s430 = sand.u32 %s30, 1
        %s431 = scalar_lea.sflag [#allocation12], %s430
        %s432 = sand.u32 %s142, 1
        %s433 = smul.addr %s432, 80
        %s434 = scalar_lea.vmem [#allocation13], %s433
        // Predicated region
        $region61: #{tpu_custom_call.1} parent=43 // pred_check
          %p435 = pneg %p155
        $region62: #{tpu_custom_call.1} parent=43 // pred_check_branch
          %437 = sbr.rel (%p435) target = $region64
        $region63: #{tpu_custom_call.1} parent=43 // pred_region
          %439 = dma.done %s431, 1280
        $region64: #{tpu_custom_call.1} parent=43 // pred_fallthru
          _
        %s440 = sand.u32 %s168, 1
        %s441 = scalar_lea.sflag [#allocation15], %s440
        %s442 = sand.u32 %s168, 1
        %s443 = smul.addr %s442, 80
        %s444 = scalar_lea.vmem [#allocation14], %s443
        // Predicated region
        $region65: #{tpu_custom_call.1} parent=43 // pred_check
          %p445 = pneg %p181
        $region66: #{tpu_custom_call.1} parent=43 // pred_check_branch
          %447 = sbr.rel (%p445) target = $region68
        $region67: #{tpu_custom_call.1} parent=43 // pred_region
          %449 = dma.done %s441, 1280
        $region68: #{tpu_custom_call.1} parent=43 // pred_fallthru
          _
        %s450 = sand.u32 %s38, 1
        %s451 = scalar_lea.sflag [#allocation6], %s450
        %s452 = sand.u32 %s38, 1
        %s453 = smul.addr %s452, 80
        %s454 = scalar_lea.vmem [#allocation5], %s453
        %p455 = pneg %p51
        %p456 = pneg %p48
        %s457 = sand.u32 %s30, 1
        %s458 = scalar_lea.sflag [#allocation9], %s457
        %s459 = sand.u32 %s64, 1
        %s460 = smul.addr %s459, 80
        %s461 = scalar_lea.vmem [#allocation8], %s460
        %p462 = pneg %p77
        %p463 = pneg %p74
        %s464 = sand.u32 %s30, 1
        %s465 = scalar_lea.sflag [#allocation9], %s464
        %s466 = sand.u32 %s90, 1
        %s467 = smul.addr %s466, 80
        %s468 = scalar_lea.vmem [#allocation10], %s467
        %p469 = pneg %p103
        %p470 = pneg %p100
        %s471 = sand.u32 %s30, 1
        %s472 = scalar_lea.sflag [#allocation12], %s471
        %s473 = sand.u32 %s116, 1
        %s474 = smul.addr %s473, 80
        %s475 = scalar_lea.vmem [#allocation11], %s474
        %p476 = pneg %p129
        %p477 = pneg %p126
        %s478 = sand.u32 %s30, 1
        %s479 = scalar_lea.sflag [#allocation12], %s478
        %s480 = sand.u32 %s142, 1
        %s481 = smul.addr %s480, 80
        %s482 = scalar_lea.vmem [#allocation13], %s481
        %p483 = pneg %p155
        %p484 = pneg %p152
        %s485 = sand.u32 %s168, 1
        %s486 = scalar_lea.sflag [#allocation15], %s485
        %s487 = sand.u32 %s168, 1
        %s488 = smul.addr %s487, 80
        %s489 = scalar_lea.vmem [#allocation14], %s488
        %p490 = pneg %p181
        %p491 = pneg %p178
        %p492 = pneg %p202
        %p493 = pneg %p199
        %s494 = smul.u32 10, %s30
        %s495 = ssub.s32 12, %s494
        %p496 = scmp.lt.s32.totalorder %s495, 10
        %s497 = scalar_select %p496, %s495, 10
        %s498 = smul.u32 8, %s497
        %s499 = smul.u32 10, %s30
        %s500 = ssub.s32 12, %s499
        %p501 = scmp.lt.s32.totalorder %s500, 10
        %s502 = scalar_select %p501, %s500, 10
        %s503 = smul.u32 8, %s502
        %s504 = smul.u32 10, %s30
        %s505 = ssub.s32 12, %s504
        %p506 = scmp.lt.s32.totalorder %s505, 10
        %s507 = scalar_select %p506, %s505, 10
        %s508 = smul.u32 8, %s507
        %s509 = smul.u32 10, %s30
        %s510 = ssub.s32 12, %s509
        %p511 = scmp.lt.s32.totalorder %s510, 10
        %s512 = scalar_select %p511, %s510, 10
        %s513 = smul.u32 8, %s512
        %s514 = smul.u32 10, %s30
        %s515 = ssub.s32 12, %s514
        %p516 = scmp.lt.s32.totalorder %s515, 10
        %s517 = scalar_select %p516, %s515, 10
        %s518 = smul.u32 8, %s517
        %s519 = smul.u32 10, %s30
        %s520 = ssub.s32 12, %s519
        %p521 = scmp.lt.s32.totalorder %s520, 10
        %s522 = scalar_select %p521, %s520, 10
        %s523 = smul.u32 8, %s522
        %s524 = smul.u32 %s30, 1280
        %p525 = scmp.eq.s32.totalorder %s30, 0
        // Predicated region
        $region69: #{tpu_custom_call.1} parent=43 // pred_check
          %p526 = pneg %p525
        $region70: #{tpu_custom_call.1} parent=43 // pred_check_branch
          %528 = sbr.rel (%p526) target = $region72
        $region71: #{tpu_custom_call.1} parent=43 // pred_region
          %529 = vst [vmem:[#allocation2] sm:$0xff] 0.0
          %530 = vst [vmem:[#allocation2 + $0x8] sm:$0xff] 0.0
          %531 = vst [vmem:[#allocation3] sm:$0xff] 0.0
          %532 = vst [vmem:[#allocation3 + $0x8] sm:$0xff] 0.0
          %533 = vst [vmem:[#allocation4] sm:$0xff] 0.0
          %534 = vst [vmem:[#allocation4 + $0x8] sm:$0xff] 0.0
        $region72: #{tpu_custom_call.1} parent=43 // pred_fallthru
          _
        %s535 = sadd.s32 %s524, 0
        %v536 = vld [vmem:[%s394] sm:$0xff]
        %v537 = vld [vmem:[%s394 + $0x8] sm:$0xff]
        %v538 = vld [vmem:[%s404] sm:$0xff]
        %v539 = vld [vmem:[%s404 + $0x8] sm:$0xff]
        %v540 = vld [vmem:[%s414] sm:$0xff]
        %v541 = vld [vmem:[%s414 + $0x8] sm:$0xff]
        %v542 = vsub.f32 %v538, %v536
        %v543 = vsub.f32 %v539, %v537
        %v544 = vmul.f32 %v542, 1.442695
        %v545 = vpow.pop %v544
        %v546 = vmul.f32 %v543, 1.442695
        %v547 = vpow.pop %v546
        %v548 = vld [vmem:[%s444] sm:$0xff]
        %v549 = vld [vmem:[%s444 + $0x8] sm:$0xff]
        %v550 = vmul.f32 %v545, %v548
        %v551 = vmul.f32 %v547, %v549
        %v552 = vmul.f32 %v540, %v548
        %v553 = vmul.f32 %v541, %v549
        %v554 = vmul.f32 %v550, %v552
        %v555 = vmul.f32 %v551, %v553
        %v556 = vmax.f32 %v550, 0.8
        %v557 = vmax.f32 %v551, 0.8
        %v558 = vmin.f32 %v556, 1.2
        %v559 = vmin.f32 %v557, 1.2
        %v560 = vmul.f32 %v558, %v552
        %v561 = vmul.f32 %v559, %v553
        %v562 = vmin.f32 %v554, %v560
        %v563 = vmin.f32 %v555, %v561
        %v564 = vlaneseq
        %v565 = vand.u32 %v564, 127
        %v566 = vadd.s32 %v565, 128
        %v567 = vstv %s535
        %v568 = vadd.s32 %v567, %v565
        %v569 = vadd.s32 %v567, %v566
        %vm570 = vcmp.lt.s32.totalorder %v568, 1500
        %vm571 = vcmp.lt.s32.totalorder %v569, 1500
        %v572 = vsel %vm570, %v562, 0.0
        %v573 = vsel %vm571, %v563, 0.0
        %v574 = vld [vmem:[%s424] sm:$0xff]
        %v575 = vld [vmem:[%s424 + $0x8] sm:$0xff]
        %v576 = vadd.f32 %v552, %v536
        %v577 = vadd.f32 %v553, %v537
        %v578 = vsub.f32 %v574, %v576
        %v579 = vsub.f32 %v575, %v577
        %v580 = vmul.f32 %v578, %v578
        %v581 = vmul.f32 %v579, %v579
        %v582 = vmul.f32 %v580, %v548
        %v583 = vmul.f32 %v581, %v549
        %v584 = vsel %vm570, %v582, 0.0
        %v585 = vsel %vm571, %v583, 0.0
        %v586 = vld [vmem:[%s434] sm:$0xff]
        %v587 = vld [vmem:[%s434 + $0x8] sm:$0xff]
        %v588 = vsel %vm570, %v586, 0.0
        %v589 = vsel %vm571, %v587, 0.0
        %v590 = vadd.f32 %v572, 0.0
        %v591 = vadd.f32 %v573, 0.0
        %v592 = vadd.f32 %v584, 0.0
        %v593 = vadd.f32 %v585, 0.0
        %v594 = vadd.f32 %v588, 0.0
        %v595 = vadd.f32 %v589, 0.0
        %s596 = sadd.s32 %s524, 256
        %s597 = scalar_lea.vmem %s394, 16 [#allocation5]
        %v598 = vld [vmem:[%s597] sm:$0xff]
        %v599 = vld [vmem:[%s597 + $0x8] sm:$0xff]
        %s600 = scalar_lea.vmem %s404, 16 [#allocation8]
        %v601 = vld [vmem:[%s600] sm:$0xff]
        %v602 = vld [vmem:[%s600 + $0x8] sm:$0xff]
        %s603 = scalar_lea.vmem %s414, 16 [#allocation10]
        %v604 = vld [vmem:[%s603] sm:$0xff]
        %v605 = vld [vmem:[%s603 + $0x8] sm:$0xff]
        %v606 = vsub.f32 %v601, %v598
        %v607 = vsub.f32 %v602, %v599
        %v608 = vmul.f32 %v606, 1.442695
        %v609 = vpow.pop %v608
        %v610 = vmul.f32 %v607, 1.442695
        %v611 = vpow.pop %v610
        %s612 = scalar_lea.vmem %s444, 16 [#allocation14]
        %v613 = vld [vmem:[%s612] sm:$0xff]
        %v614 = vld [vmem:[%s612 + $0x8] sm:$0xff]
        %v615 = vmul.f32 %v609, %v613
        %v616 = vmul.f32 %v611, %v614
        %v617 = vmul.f32 %v604, %v613
        %v618 = vmul.f32 %v605, %v614
        %v619 = vmul.f32 %v615, %v617
        %v620 = vmul.f32 %v616, %v618
        %v621 = vmax.f32 %v615, 0.8
        %v622 = vmax.f32 %v616, 0.8
        %v623 = vmin.f32 %v621, 1.2
        %v624 = vmin.f32 %v622, 1.2
        %v625 = vmul.f32 %v623, %v617
        %v626 = vmul.f32 %v624, %v618
        %v627 = vmin.f32 %v619, %v625
        %v628 = vmin.f32 %v620, %v626
        %v629 = vstv %s596
        %v630 = vadd.s32 %v629, %v565
        %v631 = vadd.s32 %v629, %v566
        %vm632 = vcmp.lt.s32.totalorder %v630, 1500
        %vm633 = vcmp.lt.s32.totalorder %v631, 1500
        %v634 = vsel %vm632, %v627, 0.0
        %v635 = vsel %vm633, %v628, 0.0
        %s636 = scalar_lea.vmem %s424, 16 [#allocation11]
        %v637 = vld [vmem:[%s636] sm:$0xff]
        %v638 = vld [vmem:[%s636 + $0x8] sm:$0xff]
        %v639 = vadd.f32 %v617, %v598
        %v640 = vadd.f32 %v618, %v599
        %v641 = vsub.f32 %v637, %v639
        %v642 = vsub.f32 %v638, %v640
        %v643 = vmul.f32 %v641, %v641
        %v644 = vmul.f32 %v642, %v642
        %v645 = vmul.f32 %v643, %v613
        %v646 = vmul.f32 %v644, %v614
        %v647 = vsel %vm632, %v645, 0.0
        %v648 = vsel %vm633, %v646, 0.0
        %s649 = scalar_lea.vmem %s434, 16 [#allocation13]
        %v650 = vld [vmem:[%s649] sm:$0xff]
        %v651 = vld [vmem:[%s649 + $0x8] sm:$0xff]
        %v652 = vsel %vm632, %v650, 0.0
        %v653 = vsel %vm633, %v651, 0.0
        %v654 = vadd.f32 %v590, %v634
        %v655 = vadd.f32 %v591, %v635
        %v656 = vadd.f32 %v592, %v647
        %v657 = vadd.f32 %v593, %v648
        %v658 = vadd.f32 %v594, %v652
        %v659 = vadd.f32 %v595, %v653
        %s660 = sadd.s32 %s524, 512
        %s661 = scalar_lea.vmem %s394, 32 [#allocation5]
        %v662 = vld [vmem:[%s661] sm:$0xff]
        %v663 = vld [vmem:[%s661 + $0x8] sm:$0xff]
        %s664 = scalar_lea.vmem %s404, 32 [#allocation8]
        %v665 = vld [vmem:[%s664] sm:$0xff]
        %v666 = vld [vmem:[%s664 + $0x8] sm:$0xff]
        %s667 = scalar_lea.vmem %s414, 32 [#allocation10]
        %v668 = vld [vmem:[%s667] sm:$0xff]
        %v669 = vld [vmem:[%s667 + $0x8] sm:$0xff]
        %v670 = vsub.f32 %v665, %v662
        %v671 = vsub.f32 %v666, %v663
        %v672 = vmul.f32 %v670, 1.442695
        %v673 = vpow.pop %v672
        %v674 = vmul.f32 %v671, 1.442695
        %v675 = vpow.pop %v674
        %s676 = scalar_lea.vmem %s444, 32 [#allocation14]
        %v677 = vld [vmem:[%s676] sm:$0xff]
        %v678 = vld [vmem:[%s676 + $0x8] sm:$0xff]
        %v679 = vmul.f32 %v673, %v677
        %v680 = vmul.f32 %v675, %v678
        %v681 = vmul.f32 %v668, %v677
        %v682 = vmul.f32 %v669, %v678
        %v683 = vmul.f32 %v679, %v681
        %v684 = vmul.f32 %v680, %v682
        %v685 = vmax.f32 %v679, 0.8
        %v686 = vmax.f32 %v680, 0.8
        %v687 = vmin.f32 %v685, 1.2
        %v688 = vmin.f32 %v686, 1.2
        %v689 = vmul.f32 %v687, %v681
        %v690 = vmul.f32 %v688, %v682
        %v691 = vmin.f32 %v683, %v689
        %v692 = vmin.f32 %v684, %v690
        %v693 = vstv %s660
        %v694 = vadd.s32 %v693, %v565
        %v695 = vadd.s32 %v693, %v566
        %vm696 = vcmp.lt.s32.totalorder %v694, 1500
        %vm697 = vcmp.lt.s32.totalorder %v695, 1500
        %v698 = vsel %vm696, %v691, 0.0
        %v699 = vsel %vm697, %v692, 0.0
        %s700 = scalar_lea.vmem %s424, 32 [#allocation11]
        %v701 = vld [vmem:[%s700] sm:$0xff]
        %v702 = vld [vmem:[%s700 + $0x8] sm:$0xff]
        %v703 = vadd.f32 %v681, %v662
        %v704 = vadd.f32 %v682, %v663
        %v705 = vsub.f32 %v701, %v703
        %v706 = vsub.f32 %v702, %v704
        %v707 = vmul.f32 %v705, %v705
        %v708 = vmul.f32 %v706, %v706
        %v709 = vmul.f32 %v707, %v677
        %v710 = vmul.f32 %v708, %v678
        %v711 = vsel %vm696, %v709, 0.0
        %v712 = vsel %vm697, %v710, 0.0
        %s713 = scalar_lea.vmem %s434, 32 [#allocation13]
        %v714 = vld [vmem:[%s713] sm:$0xff]
        %v715 = vld [vmem:[%s713 + $0x8] sm:$0xff]
        %v716 = vsel %vm696, %v714, 0.0
        %v717 = vsel %vm697, %v715, 0.0
        %v718 = vadd.f32 %v654, %v698
        %v719 = vadd.f32 %v655, %v699
        %v720 = vadd.f32 %v656, %v711
        %v721 = vadd.f32 %v657, %v712
        %v722 = vadd.f32 %v658, %v716
        %v723 = vadd.f32 %v659, %v717
        %s724 = sadd.s32 %s524, 768
        %s725 = scalar_lea.vmem %s394, 48 [#allocation5]
        %v726 = vld [vmem:[%s725] sm:$0xff]
        %v727 = vld [vmem:[%s725 + $0x8] sm:$0xff]
        %s728 = scalar_lea.vmem %s404, 48 [#allocation8]
        %v729 = vld [vmem:[%s728] sm:$0xff]
        %v730 = vld [vmem:[%s728 + $0x8] sm:$0xff]
        %s731 = scalar_lea.vmem %s414, 48 [#allocation10]
        %v732 = vld [vmem:[%s731] sm:$0xff]
        %v733 = vld [vmem:[%s731 + $0x8] sm:$0xff]
        %v734 = vsub.f32 %v729, %v726
        %v735 = vsub.f32 %v730, %v727
        %v736 = vmul.f32 %v734, 1.442695
        %v737 = vpow.pop %v736
        %v738 = vmul.f32 %v735, 1.442695
        %v739 = vpow.pop %v738
        %s740 = scalar_lea.vmem %s444, 48 [#allocation14]
        %v741 = vld [vmem:[%s740] sm:$0xff]
        %v742 = vld [vmem:[%s740 + $0x8] sm:$0xff]
        %v743 = vmul.f32 %v737, %v741
        %v744 = vmul.f32 %v739, %v742
        %v745 = vmul.f32 %v732, %v741
        %v746 = vmul.f32 %v733, %v742
        %v747 = vmul.f32 %v743, %v745
        %v748 = vmul.f32 %v744, %v746
        %v749 = vmax.f32 %v743, 0.8
        %v750 = vmax.f32 %v744, 0.8
        %v751 = vmin.f32 %v749, 1.2
        %v752 = vmin.f32 %v750, 1.2
        %v753 = vmul.f32 %v751, %v745
        %v754 = vmul.f32 %v752, %v746
        %v755 = vmin.f32 %v747, %v753
        %v756 = vmin.f32 %v748, %v754
        %v757 = vstv %s724
        %v758 = vadd.s32 %v757, %v565
        %v759 = vadd.s32 %v757, %v566
        %vm760 = vcmp.lt.s32.totalorder %v758, 1500
        %vm761 = vcmp.lt.s32.totalorder %v759, 1500
        %v762 = vsel %vm760, %v755, 0.0
        %v763 = vsel %vm761, %v756, 0.0
        %s764 = scalar_lea.vmem %s424, 48 [#allocation11]
        %v765 = vld [vmem:[%s764] sm:$0xff]
        %v766 = vld [vmem:[%s764 + $0x8] sm:$0xff]
        %v767 = vadd.f32 %v745, %v726
        %v768 = vadd.f32 %v746, %v727
        %v769 = vsub.f32 %v765, %v767
        %v770 = vsub.f32 %v766, %v768
        %v771 = vmul.f32 %v769, %v769
        %v772 = vmul.f32 %v770, %v770
        %v773 = vmul.f32 %v771, %v741
        %v774 = vmul.f32 %v772, %v742
        %v775 = vsel %vm760, %v773, 0.0
        %v776 = vsel %vm761, %v774, 0.0
        %s777 = scalar_lea.vmem %s434, 48 [#allocation13]
        %v778 = vld [vmem:[%s777] sm:$0xff]
        %v779 = vld [vmem:[%s777 + $0x8] sm:$0xff]
        %v780 = vsel %vm760, %v778, 0.0
        %v781 = vsel %vm761, %v779, 0.0
        %v782 = vadd.f32 %v718, %v762
        %v783 = vadd.f32 %v719, %v763
        %v784 = vadd.f32 %v720, %v775
        %v785 = vadd.f32 %v721, %v776
        %v786 = vadd.f32 %v722, %v780
        %v787 = vadd.f32 %v723, %v781
        %s788 = sadd.s32 %s524, 1024
        %s789 = scalar_lea.vmem %s394, 64 [#allocation5]
        %v790 = vld [vmem:[%s789] sm:$0xff]
        %v791 = vld [vmem:[%s789 + $0x8] sm:$0xff]
        %s792 = scalar_lea.vmem %s404, 64 [#allocation8]
        %v793 = vld [vmem:[%s792] sm:$0xff]
        %v794 = vld [vmem:[%s792 + $0x8] sm:$0xff]
        %s795 = scalar_lea.vmem %s414, 64 [#allocation10]
        %v796 = vld [vmem:[%s795] sm:$0xff]
        %v797 = vld [vmem:[%s795 + $0x8] sm:$0xff]
        %v798 = vsub.f32 %v793, %v790
        %v799 = vsub.f32 %v794, %v791
        %v800 = vmul.f32 %v798, 1.442695
        %v801 = vpow.pop %v800
        %v802 = vmul.f32 %v799, 1.442695
        %v803 = vpow.pop %v802
        %s804 = scalar_lea.vmem %s444, 64 [#allocation14]
        %v805 = vld [vmem:[%s804] sm:$0xff]
        %v806 = vld [vmem:[%s804 + $0x8] sm:$0xff]
        %v807 = vmul.f32 %v801, %v805
        %v808 = vmul.f32 %v803, %v806
        %v809 = vmul.f32 %v796, %v805
        %v810 = vmul.f32 %v797, %v806
        %v811 = vmul.f32 %v807, %v809
        %v812 = vmul.f32 %v808, %v810
        %v813 = vmax.f32 %v807, 0.8
        %v814 = vmax.f32 %v808, 0.8
        %v815 = vmin.f32 %v813, 1.2
        %v816 = vmin.f32 %v814, 1.2
        %v817 = vmul.f32 %v815, %v809
        %v818 = vmul.f32 %v816, %v810
        %v819 = vmin.f32 %v811, %v817
        %v820 = vmin.f32 %v812, %v818
        %v821 = vstv %s788
        %v822 = vadd.s32 %v821, %v565
        %v823 = vadd.s32 %v821, %v566
        %vm824 = vcmp.lt.s32.totalorder %v822, 1500
        %vm825 = vcmp.lt.s32.totalorder %v823, 1500
        %v826 = vsel %vm824, %v819, 0.0
        %v827 = vsel %vm825, %v820, 0.0
        %s828 = scalar_lea.vmem %s424, 64 [#allocation11]
        %v829 = vld [vmem:[%s828] sm:$0xff]
        %v830 = vld [vmem:[%s828 + $0x8] sm:$0xff]
        %v831 = vadd.f32 %v809, %v790
        %v832 = vadd.f32 %v810, %v791
        %v833 = vsub.f32 %v829, %v831
        %v834 = vsub.f32 %v830, %v832
        %v835 = vmul.f32 %v833, %v833
        %v836 = vmul.f32 %v834, %v834
        %v837 = vmul.f32 %v835, %v805
        %v838 = vmul.f32 %v836, %v806
        %v839 = vsel %vm824, %v837, 0.0
        %v840 = vsel %vm825, %v838, 0.0
        %s841 = scalar_lea.vmem %s434, 64 [#allocation13]
        %v842 = vld [vmem:[%s841] sm:$0xff]
        %v843 = vld [vmem:[%s841 + $0x8] sm:$0xff]
        %v844 = vsel %vm824, %v842, 0.0
        %v845 = vsel %vm825, %v843, 0.0
        %v846 = vadd.f32 %v782, %v826
        %v847 = vadd.f32 %v783, %v827
        %v848 = vadd.f32 %v784, %v839
        %v849 = vadd.f32 %v785, %v840
        %v850 = vadd.f32 %v786, %v844
        %v851 = vadd.f32 %v787, %v845
        %v852 = vld [vmem:[#allocation2] sm:$0xff]
        %v853 = vld [vmem:[#allocation2 + $0x8] sm:$0xff]
        %v854 = vadd.f32 %v852, %v846
        %v855 = vadd.f32 %v853, %v847
        %856 = vst [vmem:[#allocation2] sm:$0xff] %v854
        %857 = vst [vmem:[#allocation2 + $0x8] sm:$0xff] %v855
        %v858 = vld [vmem:[#allocation3] sm:$0xff]
        %v859 = vld [vmem:[#allocation3 + $0x8] sm:$0xff]
        %v860 = vadd.f32 %v858, %v848
        %v861 = vadd.f32 %v859, %v849
        %862 = vst [vmem:[#allocation3] sm:$0xff] %v860
        %863 = vst [vmem:[#allocation3 + $0x8] sm:$0xff] %v861
        %v864 = vld [vmem:[#allocation4] sm:$0xff]
        %v865 = vld [vmem:[#allocation4 + $0x8] sm:$0xff]
        %v866 = vadd.f32 %v864, %v850
        %v867 = vadd.f32 %v865, %v851
        %868 = vst [vmem:[#allocation4] sm:$0xff] %v866
        %869 = vst [vmem:[#allocation4 + $0x8] sm:$0xff] %v867
        %p870 = scmp.eq.s32.totalorder %s30, 1
        // Predicated region
        $region73: #{tpu_custom_call.1} parent=43 // pred_check
          %p871 = pneg %p870
        $region74: #{tpu_custom_call.1} parent=43 // pred_check_branch
          %873 = sbr.rel (%p871) target = $region76
        $region75: #{tpu_custom_call.1} parent=43 // pred_region
          %v874 = vld [vmem:[#allocation2] sm:$0xff]
          %v875 = vld [vmem:[#allocation2 + $0x8] sm:$0xff]
          %v876 = vadd.f32 %v874, %v875
          %877 = vadd.xlane.f32.xlu0 %v876
          %v878 = vpop.xlane.xlu0 %877
          %v879 = vrot.slane %v878, 4
          %v880 = vadd.f32 %v878, %v879
          %v881 = vrot.slane %v880, 2
          %v882 = vadd.f32 %v880, %v881
          %v883 = vrot.slane %v882, 1
          %v884 = vadd.f32 %v882, %v883
          %s885 = vtos %v884
          %s886 = ssub.f32 0.0, %s885
          %s887 = smul.f32 %s886, 8.333333e-05
          %vm888 = vcmp.eq.s32.totalorder %v565, 0
          %v889 = vstv %s887
          %v890 = vsel %vm888, %v889, 0.0
          %v891 = vld [vmem:[#allocation3] sm:$0xff]
          %v892 = vld [vmem:[#allocation3 + $0x8] sm:$0xff]
          %v893 = vadd.f32 %v891, %v892
          %894 = vadd.xlane.f32.xlu0 %v893
          %v895 = vpop.xlane.xlu0 %894
          %v896 = vrot.slane %v895, 4
          %v897 = vadd.f32 %v895, %v896
          %v898 = vrot.slane %v897, 2
          %v899 = vadd.f32 %v897, %v898
          %v900 = vrot.slane %v899, 1
          %v901 = vadd.f32 %v899, %v900
          %s902 = vtos %v901
          %s903 = smul.f32 %s902, 8.333333e-05
          %vm904 = vcmp.eq.s32.totalorder %v565, 1
          %v905 = vstv %s903
          %v906 = vsel %vm904, %v905, %v890
          %v907 = vld [vmem:[#allocation4] sm:$0xff]
          %v908 = vld [vmem:[#allocation4 + $0x8] sm:$0xff]
          %v909 = vadd.f32 %v907, %v908
          %910 = vadd.xlane.f32.xlu0 %v909
          %v911 = vpop.xlane.xlu0 %910
          %v912 = vrot.slane %v911, 4
          %v913 = vadd.f32 %v911, %v912
          %v914 = vrot.slane %v913, 2
          %v915 = vadd.f32 %v913, %v914
          %v916 = vrot.slane %v915, 1
          %v917 = vadd.f32 %v915, %v916
          %s918 = vtos %v917
          %s919 = smul.f32 %s918, 0.01
          %s920 = smul.f32 %s919, 8.333333e-05
          %vm921 = vcmp.eq.s32.totalorder %v565, 2
          %v922 = vstv %s920
          %v923 = vsel %vm921, %v922, %v906
          %924 = vst [vmem:[#allocation16] sm:$0xff] %v923
        $region76: #{tpu_custom_call.1} parent=43 // pred_fallthru
          _
        // Predicated region
        $region77: #{tpu_custom_call.1} parent=43 // pred_check
          %p925 = pneg %p199
        $region78: #{tpu_custom_call.1} parent=43 // pred_check_branch
          %927 = sbr.rel (%p925) target = $region80
        $region79: #{tpu_custom_call.1} parent=43 // pred_region
          %929 = vsyncadd [#allocation7], 0
          %s931 = sshll.u32 [#allocation16], 4
          %s932 = int_to_ptr.vmem [resolvable:$true] %s931
          %s933 = sshll.u32 %s6, 4
          %s934 = int_to_ptr.hbm [resolvable:$true] %s933
          %936 = dma.vmem_to_hbm [thread:$0]  %s932, 128, %s934, [#allocation7]
        $region80: #{tpu_custom_call.1} parent=43 // pred_fallthru
          _
        // Predicated region
        $region81: #{tpu_custom_call.1} parent=43 // pred_check
          %p937 = pneg %p199
        $region82: #{tpu_custom_call.1} parent=43 // pred_check_branch
          %939 = sbr.rel (%p937) target = $region84
        $region83: #{tpu_custom_call.1} parent=43 // pred_region
          %941 = dma.done [#allocation7], 128
        $region84: #{tpu_custom_call.1} parent=43 // pred_fallthru
          _
      $region44: #{tpu_custom_call.1} parent=5 // pred_fallthru
        _
      %p942 = scmp.le.s32.totalorder 2, %s25
      // Predicated region
      $region85: #{tpu_custom_call.1} parent=5 // pred_check
        %p943 = pneg %p942
      $region86: #{tpu_custom_call.1} parent=5 // pred_check_branch
        %945 = sbr.rel (%p943) target = $region88
      $region87: #{tpu_custom_call.1} parent=5 // pred_region
        %s946 = ssub.s32 %s25, 2
      $region88: #{tpu_custom_call.1} parent=5 // pred_fallthru
        _
    $region6: #{tpu_custom_call.1} parent=1 // loop_footer
      %s29 = sadd.s32 1, %s25
    $region7: #{tpu_custom_call.1} parent=1 // loop_footer_branch
      %24 = sbr.rel target = $region3
    $region8: #{tpu_custom_call.1} parent=1 // loop_exit
      _
    %947 = vsyncpa [#allocation6], 1
    %s948 = scalar_lea.sflag [#allocation6], 1
    %949 = vsyncpa %s948, 1
    %950 = vsyncpa [#allocation9], 1
    %s951 = scalar_lea.sflag [#allocation9], 1
    %952 = vsyncpa %s951, 1
    %953 = vsyncpa [#allocation12], 1
    %s954 = scalar_lea.sflag [#allocation12], 1
    %955 = vsyncpa %s954, 1
    %956 = vsyncpa [#allocation15], 1
    %s957 = scalar_lea.sflag [#allocation15], 1
    %958 = vsyncpa %s957, 1
    %959 = vsyncpa [#allocation7], 1
    %s960 = scalar_lea.sflag [#allocation7], 1
    %961 = vsyncpa %s960, 1

</llo_original>
